<compile_context>
chip_gen: v5e
topology: v5e:2x2
jax: 0.10.0
libtpu: 0.0.40
codegen_flags: <defaults>
</compile_context>

<pallas_src>
import functools

import jax
import jax.numpy as jnp
from jax import lax
from jax.experimental import pallas as pl
from jax.experimental.pallas import tpu as pltpu

LANE = 128  # TPU vreg lane width


def _round_up(x, m):
    return -(-x // m) * m


def _interleave_gates(a_f, a_b, H):
    """Interleave two [..., 4H] gate matrices (PyTorch gate order i,f,g,o per direction)
    into one [..., 8H] gate-major layout: [i_f, i_b, f_f, f_b, g_f, g_b, o_f, o_b]."""
    blocks = []
    for g in range(4):
        blocks.append(a_f[..., g * H:(g + 1) * H])
        blocks.append(a_b[..., g * H:(g + 1) * H])
    return jnp.concatenate(blocks, axis=-1)


def pack_params(params, *, rnnSize, numTags):
    """Build the interleaved / block-diagonal / lane-padded weights the kernel expects.
    Call ONCE per model and cache the result — do not rebuild per sentence."""
    H = rnnSize
    z_ih = jnp.zeros_like(params["wih_f"])
    z_hh = jnp.zeros_like(params["whh_f"])
    w_in = jnp.concatenate(
        [_interleave_gates(params["wih_f"], z_ih, H),           # rows 0:E  -> fwd blocks
         _interleave_gates(z_ih, params["wih_b"], H)], axis=0)  # rows E:2E -> bwd blocks
    b_in = _interleave_gates(params["b_f"], params["b_b"], H)   # [1, 8H]
    w_rec = jnp.concatenate(
        [_interleave_gates(params["whh_f"], z_hh, H),           # rows 0:H  (h_f)
         _interleave_gates(z_hh, params["whh_b"], H)], axis=0)  # rows H:2H (h_b)
    n_pad = _round_up(max(numTags, LANE), LANE)
    w_out = jnp.pad(params["wlin"], ((0, 0), (0, n_pad - numTags)))  # [2H, Npad]
    b_out = jnp.pad(params["blin"], ((0, 0), (0, n_pad - numTags)))  # [1, Npad]
    return dict(w_in=w_in, b_in=b_in, w_rec=w_rec,
                w_out_f=w_out[:H], w_out_b=w_out[H:], b_out=b_out)


def _tagger_kernel(xcat_ref,     # VMEM [T, B, 2E]  row (t,b) = [emb(tok t) | emb(tok T-1-t)]
                   w_in_ref,     # VMEM [2E, 8H]    block-diag, gate-interleaved input proj
                   b_in_ref,     # VMEM [1, 8H]     combined (b_ih + b_hh), interleaved
                   w_rec_ref,    # VMEM [2H, 8H]    block-diag, gate-interleaved recurrent W
                   w_out_f_ref,  # VMEM [H, Npad]   linear rows for forward hidden
                   w_out_b_ref,  # VMEM [H, Npad]   linear rows for backward hidden
                   b_out_ref,    # VMEM [1, Npad]
                   out_ref,      # VMEM [T, B, Npad]
                   *, T, B, H):
    """Fused bidirectional LSTM tagger forward for a block of B sentences of length T."""
    w_in = w_in_ref[...]
    b_in = b_in_ref[...]
    w_rec = w_rec_ref[...]

    # 1) Hoisted input projection for BOTH directions and all timesteps — off the serial
    #    recurrence critical path.  Kept as in-register values (no VMEM scratch).
    zin = [jnp.dot(xcat_ref[t], w_in, preferred_element_type=jnp.float32) + b_in
           for t in range(T)]                                   # T x [B, 8H]

    # 2) Fused forward+backward recurrence: one [B,2H]@[2H,8H] MXU push per step.
    fwd = [None] * T
    bwd = [None] * T
    h = jnp.zeros((B, 2 * H), jnp.float32)                      # [h_f | h_b]
    c = jnp.zeros((B, 2 * H), jnp.float32)
    for s in range(T):                                          # T static & small: unroll
        z = zin[s] + jnp.dot(h, w_rec, preferred_element_type=jnp.float32)   # [B, 8H]
        # exact sigmoid via a single EUP tanh push: sigmoid(z) = 0.5*tanh(0.5*z) + 0.5
        sig = 0.5 * jnp.tanh(0.5 * z) + 0.5
        i_cat = sig[:, 0 * H:2 * H]                             # [i_f | i_b]
        f_cat = sig[:, 2 * H:4 * H]                             # [f_f | f_b]
        o_cat = sig[:, 6 * H:8 * H]                             # [o_f | o_b]
        g_cat = jnp.tanh(z[:, 4 * H:6 * H])                     # tanh only on g slice
        c = f_cat * c + i_cat * g_cat                           # [B, 2H]
        h = o_cat * jnp.tanh(c)                                 # [B, 2H]
        fwd[s] = h[:, 0:H]                                      # fwd hidden of token s
        bwd[T - 1 - s] = h[:, H:2 * H]                          # bwd hidden of token T-1-s

    # 3) Final linear onto a lane-dense (padded to 128) output tile; one contiguous
    #    [B, Npad] row-block store per timestep, no concat of directions needed.
    w_out_f = w_out_f_ref[...]
    w_out_b = w_out_b_ref[...]
    b_out = b_out_ref[...]
    for t in range(T):
        out_ref[t] = (jnp.dot(fwd[t], w_out_f, preferred_element_type=jnp.float32)
                      + jnp.dot(bwd[t], w_out_b, preferred_element_type=jnp.float32)
                      + b_out)


def tagger_forward_batched(sentences, emb, packed, *, rnnSize, numTags, block_sents=8):
    """Run the tagger on B same-length sentences at once (each sentence is processed
    exactly as the PyTorch module would process it individually)."""
    H = rnnSize
    B, T = sentences.shape
    numWords, E = emb.shape
    n_pad = packed["w_out_f"].shape[1]

    # Embedding gather stays in XLA (vocab table lives in HBM, never enters VMEM);
    # clamp ids so an out-of-range id cannot read arbitrary memory.
    ids = jnp.clip(sentences.astype(jnp.int32), 0, numWords - 1)
    x = jnp.take(emb, ids, axis=0)                              # [B, T, E]
    x_tm = jnp.transpose(x, (1, 0, 2))                          # [T, B, E] time-major
    xcat = jnp.concatenate([x_tm, x_tm[::-1]], axis=-1)         # [T, B, 2E] fwd | reversed

    # Batch-block tiling for the grid ("parallel" -> uses v7x's second TensorCore).
    if B <= block_sents:
        B_blk, B_pad = B, B
    else:
        B_blk = _round_up(block_sents, 8)                       # sublane-aligned block
        B_pad = _round_up(B, B_blk)
    if B_pad != B:
        xcat = jnp.pad(xcat, ((0, 0), (0, B_pad - B), (0, 0)))

    kernel = functools.partial(_tagger_kernel, T=T, B=B_blk, H=H)
    const = lambda g: (0, 0)                                    # weights: VMEM-resident
    out_pad = pl.pallas_call(
        kernel,
        out_shape=jax.ShapeDtypeStruct((T, B_pad, n_pad), jnp.float32),
        grid=(B_pad // B_blk,),
        in_specs=[
            pl.BlockSpec((T, B_blk, 2 * E), lambda g: (0, g, 0)),
            pl.BlockSpec((2 * E, 8 * H), const),
            pl.BlockSpec((1, 8 * H), const),
            pl.BlockSpec((2 * H, 8 * H), const),
            pl.BlockSpec((H, n_pad), const),
            pl.BlockSpec((H, n_pad), const),
            pl.BlockSpec((1, n_pad), const),
        ],
        out_specs=pl.BlockSpec((T, B_blk, n_pad), lambda g: (0, g, 0)),
        compiler_params=pltpu.CompilerParams(dimension_semantics=("parallel",)),
    )(xcat, packed["w_in"], packed["b_in"], packed["w_rec"],
      packed["w_out_f"], packed["w_out_b"], packed["b_out"])

    # [T, B, Npad] -> [B, T, numTags]
    return jnp.transpose(out_pad[:, :B, :numTags], (1, 0, 2))


def tagger_forward(sentence, emb, packed, *, rnnSize, numTags):
    """Single-sentence path (exact module semantics): [T] int ids -> [T, numTags]."""
    return tagger_forward_batched(sentence[None], emb, packed,
                                  rnnSize=rnnSize, numTags=numTags)[0]


# ---------------- pure-JAX reference for validation ----------------
def _reference(sentence, params, *, rnnSize):
    H = rnnSize
    emb = params["emb"][sentence]                               # [T, E]

    def make_cell(wih, whh, b):
        def cell(carry, x_t):
            h, c = carry
            z = x_t[None, :] @ wih + h @ whh + b                # [1, 4H]
            i = jax.nn.sigmoid(z[:, 0 * H:1 * H])
            f = jax.nn.sigmoid(z[:, 1 * H:2 * H])
            g = jnp.tanh(z[:, 2 * H:3 * H])
            o = jax.nn.sigmoid(z[:, 3 * H:4 * H])
            c = f * c + i * g
            h = o * jnp.tanh(c)
            return (h, c), h[0]
        return cell

    h0 = jnp.zeros((1, H), jnp.float32)
    c0 = jnp.zeros((1, H), jnp.float32)
    _, fwd = lax.scan(make_cell(params["wih_f"], params["whh_f"], params["b_f"]),
                      (h0, c0), emb)
    _, bwd = lax.scan(make_cell(params["wih_b"], params["whh_b"], params["b_b"]),
                      (h0, c0), emb[::-1])
    bwd = bwd[::-1]
    hcat = jnp.concatenate([fwd, bwd], axis=-1)                 # [T, 2H]
    return hcat @ params["wlin"] + params["blin"]


if __name__ == "__main__":
    numWords, numTags, embSize, rnnSize = 100, 16, 32, 32
    T, B = 8, 4

    key = jax.random.PRNGKey(0)
    ks = jax.random.split(key, 10)

    def u(k, shape, scale=0.1):
        return jax.random.uniform(k, shape, jnp.float32, -1.0, 1.0) * scale

    params = {
        "emb":   u(ks[0], (numWords, embSize), 1.0),
        "wih_f": u(ks[1], (embSize, 4 * rnnSize)),
        "whh_f": u(ks[2], (rnnSize, 4 * rnnSize)),
        "b_f":   u(ks[3], (1, 4 * rnnSize)),        # b_ih + b_hh combined
        "wih_b": u(ks[4], (embSize, 4 * rnnSize)),
        "whh_b": u(ks[5], (rnnSize, 4 * rnnSize)),
        "b_b":   u(ks[6], (1, 4 * rnnSize)),
        "wlin":  u(ks[7], (2 * rnnSize, numTags)),
        "blin":  u(ks[8], (1, numTags)),
    }
    sentences = jax.random.randint(ks[9], (B, T), 0, numWords, dtype=jnp.int32)

    # Pack/interleave/pad the weights ONCE per model (cached), not per sentence.
    packed = pack_params(params, rnnSize=rnnSize, numTags=numTags)

    fwd_batched = jax.jit(functools.partial(
        tagger_forward_batched, rnnSize=rnnSize, numTags=numTags))
    fwd_single = jax.jit(functools.partial(
        tagger_forward, rnnSize=rnnSize, numTags=numTags))

    out_b = jax.block_until_ready(fwd_batched(sentences, params["emb"], packed))
    out_1 = jax.block_until_ready(fwd_single(sentences[0], params["emb"], packed))

    ref_b = jax.vmap(lambda s: _reference(s, params, rnnSize=rnnSize))(sentences)

    assert out_b.shape == (B, T, numTags), out_b.shape
    assert out_1.shape == (T, numTags), out_1.shape
    err_b = float(jnp.abs(out_b - ref_b).max())
    err_1 = float(jnp.abs(out_1 - ref_b[0]).max())
    assert jnp.allclose(out_b, ref_b, atol=1e-3, rtol=1e-3), err_b
    assert jnp.allclose(out_1, ref_b[0], atol=1e-3, rtol=1e-3), err_1
    print("KERNEL_OK")
</pallas_src>

<mosaic_0001>
module attributes {stable_mosaic.version = 11 : i64} {
  func.func @_tagger_kernel(%arg0: i32, %arg1: memref<8x4x64xf32, #tpu.memory_space<vmem>>, %arg2: memref<64x256xf32, #tpu.memory_space<vmem>>, %arg3: memref<1x256xf32, #tpu.memory_space<vmem>>, %arg4: memref<64x256xf32, #tpu.memory_space<vmem>>, %arg5: memref<32x128xf32, #tpu.memory_space<vmem>>, %arg6: memref<32x128xf32, #tpu.memory_space<vmem>>, %arg7: memref<1x128xf32, #tpu.memory_space<vmem>>, %arg8: memref<8x4x128xf32, #tpu.memory_space<vmem>>) attributes {dimension_semantics = [#tpu.dimension_semantics<parallel>], iteration_bounds = array<i64: 1>, scalar_prefetch = 0 : i64, scratch_operands = 0 : i64, tpu.core_type = #tpu.core_type<tc>, window_params = [{transform_indices = @transform_0, window_bounds = array<i64: 8, 4, 64>}, {pipeline_mode = #tpu.pipeline_mode<synchronous>, transform_indices = @transform_1, window_bounds = array<i64: 64, 256>}, {pipeline_mode = #tpu.pipeline_mode<synchronous>, transform_indices = @transform_2, window_bounds = array<i64: 1, 256>}, {pipeline_mode = #tpu.pipeline_mode<synchronous>, transform_indices = @transform_3, window_bounds = array<i64: 64, 256>}, {pipeline_mode = #tpu.pipeline_mode<synchronous>, transform_indices = @transform_4, window_bounds = array<i64: 32, 128>}, {pipeline_mode = #tpu.pipeline_mode<synchronous>, transform_indices = @transform_5, window_bounds = array<i64: 32, 128>}, {pipeline_mode = #tpu.pipeline_mode<synchronous>, transform_indices = @transform_6, window_bounds = array<i64: 1, 128>}, {transform_indices = @transform_7, window_bounds = array<i64: 8, 4, 128>}]} {
    %c0 = arith.constant 0 : index
    %c0_0 = arith.constant 0 : index
    %0 = vector.load %arg2[%c0, %c0_0] : memref<64x256xf32, #tpu.memory_space<vmem>>, vector<64x256xf32>
    %c0_1 = arith.constant 0 : index
    %c0_2 = arith.constant 0 : index
    %1 = vector.load %arg3[%c0_1, %c0_2] : memref<1x256xf32, #tpu.memory_space<vmem>>, vector<1x256xf32>
    %c0_3 = arith.constant 0 : index
    %c0_4 = arith.constant 0 : index
    %2 = vector.load %arg4[%c0_3, %c0_4] : memref<64x256xf32, #tpu.memory_space<vmem>>, vector<64x256xf32>
    %c0_5 = arith.constant 0 : index
    %c0_6 = arith.constant 0 : index
    %c0_7 = arith.constant 0 : index
    %3 = vector.load %arg1[%c0_5, %c0_6, %c0_7] : memref<8x4x64xf32, #tpu.memory_space<vmem>>, vector<1x4x64xf32>
    %4 = vector.shape_cast %3 : vector<1x4x64xf32> to vector<4x64xf32>
    %cst = arith.constant dense<0.000000e+00> : vector<4x256xf32>
    %5 = tpu.matmul %4, %0, %cst {dimension_numbers = #tpu.dot_dimension_numbers<[1], [0], [0], [1], [0, 0, 1, 1], [], []>} : vector<4x64xf32>, vector<64x256xf32>, vector<4x256xf32> -> vector<4x256xf32>
    %6 = vector.broadcast %1 : vector<1x256xf32> to vector<4x256xf32>
    %7 = arith.addf %5, %6 : vector<4x256xf32>
    %c1 = arith.constant 1 : index
    %c0_8 = arith.constant 0 : index
    %c0_9 = arith.constant 0 : index
    %8 = vector.load %arg1[%c1, %c0_8, %c0_9] : memref<8x4x64xf32, #tpu.memory_space<vmem>>, vector<1x4x64xf32>
    %9 = vector.shape_cast %8 : vector<1x4x64xf32> to vector<4x64xf32>
    %cst_10 = arith.constant dense<0.000000e+00> : vector<4x256xf32>
    %10 = tpu.matmul %9, %0, %cst_10 {dimension_numbers = #tpu.dot_dimension_numbers<[1], [0], [0], [1], [0, 0, 1, 1], [], []>} : vector<4x64xf32>, vector<64x256xf32>, vector<4x256xf32> -> vector<4x256xf32>
    %11 = vector.broadcast %1 : vector<1x256xf32> to vector<4x256xf32>
    %12 = arith.addf %10, %11 : vector<4x256xf32>
    %c2 = arith.constant 2 : index
    %c0_11 = arith.constant 0 : index
    %c0_12 = arith.constant 0 : index
    %13 = vector.load %arg1[%c2, %c0_11, %c0_12] : memref<8x4x64xf32, #tpu.memory_space<vmem>>, vector<1x4x64xf32>
    %14 = vector.shape_cast %13 : vector<1x4x64xf32> to vector<4x64xf32>
    %cst_13 = arith.constant dense<0.000000e+00> : vector<4x256xf32>
    %15 = tpu.matmul %14, %0, %cst_13 {dimension_numbers = #tpu.dot_dimension_numbers<[1], [0], [0], [1], [0, 0, 1, 1], [], []>} : vector<4x64xf32>, vector<64x256xf32>, vector<4x256xf32> -> vector<4x256xf32>
    %16 = vector.broadcast %1 : vector<1x256xf32> to vector<4x256xf32>
    %17 = arith.addf %15, %16 : vector<4x256xf32>
    %c3 = arith.constant 3 : index
    %c0_14 = arith.constant 0 : index
    %c0_15 = arith.constant 0 : index
    %18 = vector.load %arg1[%c3, %c0_14, %c0_15] : memref<8x4x64xf32, #tpu.memory_space<vmem>>, vector<1x4x64xf32>
    %19 = vector.shape_cast %18 : vector<1x4x64xf32> to vector<4x64xf32>
    %cst_16 = arith.constant dense<0.000000e+00> : vector<4x256xf32>
    %20 = tpu.matmul %19, %0, %cst_16 {dimension_numbers = #tpu.dot_dimension_numbers<[1], [0], [0], [1], [0, 0, 1, 1], [], []>} : vector<4x64xf32>, vector<64x256xf32>, vector<4x256xf32> -> vector<4x256xf32>
    %21 = vector.broadcast %1 : vector<1x256xf32> to vector<4x256xf32>
    %22 = arith.addf %20, %21 : vector<4x256xf32>
    %c4 = arith.constant 4 : index
    %c0_17 = arith.constant 0 : index
    %c0_18 = arith.constant 0 : index
    %23 = vector.load %arg1[%c4, %c0_17, %c0_18] : memref<8x4x64xf32, #tpu.memory_space<vmem>>, vector<1x4x64xf32>
    %24 = vector.shape_cast %23 : vector<1x4x64xf32> to vector<4x64xf32>
    %cst_19 = arith.constant dense<0.000000e+00> : vector<4x256xf32>
    %25 = tpu.matmul %24, %0, %cst_19 {dimension_numbers = #tpu.dot_dimension_numbers<[1], [0], [0], [1], [0, 0, 1, 1], [], []>} : vector<4x64xf32>, vector<64x256xf32>, vector<4x256xf32> -> vector<4x256xf32>
    %26 = vector.broadcast %1 : vector<1x256xf32> to vector<4x256xf32>
    %27 = arith.addf %25, %26 : vector<4x256xf32>
    %c5 = arith.constant 5 : index
    %c0_20 = arith.constant 0 : index
    %c0_21 = arith.constant 0 : index
    %28 = vector.load %arg1[%c5, %c0_20, %c0_21] : memref<8x4x64xf32, #tpu.memory_space<vmem>>, vector<1x4x64xf32>
    %29 = vector.shape_cast %28 : vector<1x4x64xf32> to vector<4x64xf32>
    %cst_22 = arith.constant dense<0.000000e+00> : vector<4x256xf32>
    %30 = tpu.matmul %29, %0, %cst_22 {dimension_numbers = #tpu.dot_dimension_numbers<[1], [0], [0], [1], [0, 0, 1, 1], [], []>} : vector<4x64xf32>, vector<64x256xf32>, vector<4x256xf32> -> vector<4x256xf32>
    %31 = vector.broadcast %1 : vector<1x256xf32> to vector<4x256xf32>
    %32 = arith.addf %30, %31 : vector<4x256xf32>
    %c6 = arith.constant 6 : index
    %c0_23 = arith.constant 0 : index
    %c0_24 = arith.constant 0 : index
    %33 = vector.load %arg1[%c6, %c0_23, %c0_24] : memref<8x4x64xf32, #tpu.memory_space<vmem>>, vector<1x4x64xf32>
    %34 = vector.shape_cast %33 : vector<1x4x64xf32> to vector<4x64xf32>
    %cst_25 = arith.constant dense<0.000000e+00> : vector<4x256xf32>
    %35 = tpu.matmul %34, %0, %cst_25 {dimension_numbers = #tpu.dot_dimension_numbers<[1], [0], [0], [1], [0, 0, 1, 1], [], []>} : vector<4x64xf32>, vector<64x256xf32>, vector<4x256xf32> -> vector<4x256xf32>
    %36 = vector.broadcast %1 : vector<1x256xf32> to vector<4x256xf32>
    %37 = arith.addf %35, %36 : vector<4x256xf32>
    %c7 = arith.constant 7 : index
    %c0_26 = arith.constant 0 : index
    %c0_27 = arith.constant 0 : index
    %38 = vector.load %arg1[%c7, %c0_26, %c0_27] : memref<8x4x64xf32, #tpu.memory_space<vmem>>, vector<1x4x64xf32>
    %39 = vector.shape_cast %38 : vector<1x4x64xf32> to vector<4x64xf32>
    %cst_28 = arith.constant dense<0.000000e+00> : vector<4x256xf32>
    %40 = tpu.matmul %39, %0, %cst_28 {dimension_numbers = #tpu.dot_dimension_numbers<[1], [0], [0], [1], [0, 0, 1, 1], [], []>} : vector<4x64xf32>, vector<64x256xf32>, vector<4x256xf32> -> vector<4x256xf32>
    %41 = vector.broadcast %1 : vector<1x256xf32> to vector<4x256xf32>
    %42 = arith.addf %40, %41 : vector<4x256xf32>
    %cst_29 = arith.constant 0.000000e+00 : f32
    %43 = vector.broadcast %cst_29 : f32 to vector<4x64xf32>
    %cst_30 = arith.constant 0.000000e+00 : f32
    %44 = vector.broadcast %cst_30 : f32 to vector<4x64xf32>
    %cst_31 = arith.constant dense<0.000000e+00> : vector<4x256xf32>
    %45 = tpu.matmul %43, %2, %cst_31 {dimension_numbers = #tpu.dot_dimension_numbers<[1], [0], [0], [1], [0, 0, 1, 1], [], []>} : vector<4x64xf32>, vector<64x256xf32>, vector<4x256xf32> -> vector<4x256xf32>
    %46 = arith.addf %7, %45 : vector<4x256xf32>
    %cst_32 = arith.constant 5.000000e-01 : f32
    %47 = vector.broadcast %cst_32 : f32 to vector<4x256xf32>
    %48 = arith.mulf %47, %46 : vector<4x256xf32>
    %49 = math.tanh %48 : vector<4x256xf32>
    %cst_33 = arith.constant 5.000000e-01 : f32
    %50 = vector.broadcast %cst_33 : f32 to vector<4x256xf32>
    %51 = arith.mulf %50, %49 : vector<4x256xf32>
    %cst_34 = arith.constant 5.000000e-01 : f32
    %52 = vector.broadcast %cst_34 : f32 to vector<4x256xf32>
    %53 = arith.addf %51, %52 : vector<4x256xf32>
    %54 = vector.extract_strided_slice %53 {offsets = [0, 0], sizes = [4, 64], strides = [1, 1]} : vector<4x256xf32> to vector<4x64xf32>
    %55 = vector.extract_strided_slice %53 {offsets = [0, 64], sizes = [4, 64], strides = [1, 1]} : vector<4x256xf32> to vector<4x64xf32>
    %56 = vector.extract_strided_slice %53 {offsets = [0, 192], sizes = [4, 64], strides = [1, 1]} : vector<4x256xf32> to vector<4x64xf32>
    %57 = vector.extract_strided_slice %46 {offsets = [0, 128], sizes = [4, 64], strides = [1, 1]} : vector<4x256xf32> to vector<4x64xf32>
    %58 = math.tanh %57 : vector<4x64xf32>
    %59 = arith.mulf %55, %44 : vector<4x64xf32>
    %60 = arith.mulf %54, %58 : vector<4x64xf32>
    %61 = arith.addf %59, %60 : vector<4x64xf32>
    %62 = math.tanh %61 : vector<4x64xf32>
    %63 = arith.mulf %56, %62 : vector<4x64xf32>
    %64 = vector.extract_strided_slice %63 {offsets = [0, 0], sizes = [4, 32], strides = [1, 1]} : vector<4x64xf32> to vector<4x32xf32>
    %65 = vector.extract_strided_slice %63 {offsets = [0, 32], sizes = [4, 32], strides = [1, 1]} : vector<4x64xf32> to vector<4x32xf32>
    %cst_35 = arith.constant dense<0.000000e+00> : vector<4x256xf32>
    %66 = tpu.matmul %63, %2, %cst_35 {dimension_numbers = #tpu.dot_dimension_numbers<[1], [0], [0], [1], [0, 0, 1, 1], [], []>} : vector<4x64xf32>, vector<64x256xf32>, vector<4x256xf32> -> vector<4x256xf32>
    %67 = arith.addf %12, %66 : vector<4x256xf32>
    %cst_36 = arith.constant 5.000000e-01 : f32
    %68 = vector.broadcast %cst_36 : f32 to vector<4x256xf32>
    %69 = arith.mulf %68, %67 : vector<4x256xf32>
    %70 = math.tanh %69 : vector<4x256xf32>
    %cst_37 = arith.constant 5.000000e-01 : f32
    %71 = vector.broadcast %cst_37 : f32 to vector<4x256xf32>
    %72 = arith.mulf %71, %70 : vector<4x256xf32>
    %cst_38 = arith.constant 5.000000e-01 : f32
    %73 = vector.broadcast %cst_38 : f32 to vector<4x256xf32>
    %74 = arith.addf %72, %73 : vector<4x256xf32>
    %75 = vector.extract_strided_slice %74 {offsets = [0, 0], sizes = [4, 64], strides = [1, 1]} : vector<4x256xf32> to vector<4x64xf32>
    %76 = vector.extract_strided_slice %74 {offsets = [0, 64], sizes = [4, 64], strides = [1, 1]} : vector<4x256xf32> to vector<4x64xf32>
    %77 = vector.extract_strided_slice %74 {offsets = [0, 192], sizes = [4, 64], strides = [1, 1]} : vector<4x256xf32> to vector<4x64xf32>
    %78 = vector.extract_strided_slice %67 {offsets = [0, 128], sizes = [4, 64], strides = [1, 1]} : vector<4x256xf32> to vector<4x64xf32>
    %79 = math.tanh %78 : vector<4x64xf32>
    %80 = arith.mulf %76, %61 : vector<4x64xf32>
    %81 = arith.mulf %75, %79 : vector<4x64xf32>
    %82 = arith.addf %80, %81 : vector<4x64xf32>
    %83 = math.tanh %82 : vector<4x64xf32>
    %84 = arith.mulf %77, %83 : vector<4x64xf32>
    %85 = vector.extract_strided_slice %84 {offsets = [0, 0], sizes = [4, 32], strides = [1, 1]} : vector<4x64xf32> to vector<4x32xf32>
    %86 = vector.extract_strided_slice %84 {offsets = [0, 32], sizes = [4, 32], strides = [1, 1]} : vector<4x64xf32> to vector<4x32xf32>
    %cst_39 = arith.constant dense<0.000000e+00> : vector<4x256xf32>
    %87 = tpu.matmul %84, %2, %cst_39 {dimension_numbers = #tpu.dot_dimension_numbers<[1], [0], [0], [1], [0, 0, 1, 1], [], []>} : vector<4x64xf32>, vector<64x256xf32>, vector<4x256xf32> -> vector<4x256xf32>
    %88 = arith.addf %17, %87 : vector<4x256xf32>
    %cst_40 = arith.constant 5.000000e-01 : f32
    %89 = vector.broadcast %cst_40 : f32 to vector<4x256xf32>
    %90 = arith.mulf %89, %88 : vector<4x256xf32>
    %91 = math.tanh %90 : vector<4x256xf32>
    %cst_41 = arith.constant 5.000000e-01 : f32
    %92 = vector.broadcast %cst_41 : f32 to vector<4x256xf32>
    %93 = arith.mulf %92, %91 : vector<4x256xf32>
    %cst_42 = arith.constant 5.000000e-01 : f32
    %94 = vector.broadcast %cst_42 : f32 to vector<4x256xf32>
    %95 = arith.addf %93, %94 : vector<4x256xf32>
    %96 = vector.extract_strided_slice %95 {offsets = [0, 0], sizes = [4, 64], strides = [1, 1]} : vector<4x256xf32> to vector<4x64xf32>
    %97 = vector.extract_strided_slice %95 {offsets = [0, 64], sizes = [4, 64], strides = [1, 1]} : vector<4x256xf32> to vector<4x64xf32>
    %98 = vector.extract_strided_slice %95 {offsets = [0, 192], sizes = [4, 64], strides = [1, 1]} : vector<4x256xf32> to vector<4x64xf32>
    %99 = vector.extract_strided_slice %88 {offsets = [0, 128], sizes = [4, 64], strides = [1, 1]} : vector<4x256xf32> to vector<4x64xf32>
    %100 = math.tanh %99 : vector<4x64xf32>
    %101 = arith.mulf %97, %82 : vector<4x64xf32>
    %102 = arith.mulf %96, %100 : vector<4x64xf32>
    %103 = arith.addf %101, %102 : vector<4x64xf32>
    %104 = math.tanh %103 : vector<4x64xf32>
    %105 = arith.mulf %98, %104 : vector<4x64xf32>
    %106 = vector.extract_strided_slice %105 {offsets = [0, 0], sizes = [4, 32], strides = [1, 1]} : vector<4x64xf32> to vector<4x32xf32>
    %107 = vector.extract_strided_slice %105 {offsets = [0, 32], sizes = [4, 32], strides = [1, 1]} : vector<4x64xf32> to vector<4x32xf32>
    %cst_43 = arith.constant dense<0.000000e+00> : vector<4x256xf32>
    %108 = tpu.matmul %105, %2, %cst_43 {dimension_numbers = #tpu.dot_dimension_numbers<[1], [0], [0], [1], [0, 0, 1, 1], [], []>} : vector<4x64xf32>, vector<64x256xf32>, vector<4x256xf32> -> vector<4x256xf32>
    %109 = arith.addf %22, %108 : vector<4x256xf32>
    %cst_44 = arith.constant 5.000000e-01 : f32
    %110 = vector.broadcast %cst_44 : f32 to vector<4x256xf32>
    %111 = arith.mulf %110, %109 : vector<4x256xf32>
    %112 = math.tanh %111 : vector<4x256xf32>
    %cst_45 = arith.constant 5.000000e-01 : f32
    %113 = vector.broadcast %cst_45 : f32 to vector<4x256xf32>
    %114 = arith.mulf %113, %112 : vector<4x256xf32>
    %cst_46 = arith.constant 5.000000e-01 : f32
    %115 = vector.broadcast %cst_46 : f32 to vector<4x256xf32>
    %116 = arith.addf %114, %115 : vector<4x256xf32>
    %117 = vector.extract_strided_slice %116 {offsets = [0, 0], sizes = [4, 64], strides = [1, 1]} : vector<4x256xf32> to vector<4x64xf32>
    %118 = vector.extract_strided_slice %116 {offsets = [0, 64], sizes = [4, 64], strides = [1, 1]} : vector<4x256xf32> to vector<4x64xf32>
    %119 = vector.extract_strided_slice %116 {offsets = [0, 192], sizes = [4, 64], strides = [1, 1]} : vector<4x256xf32> to vector<4x64xf32>
    %120 = vector.extract_strided_slice %109 {offsets = [0, 128], sizes = [4, 64], strides = [1, 1]} : vector<4x256xf32> to vector<4x64xf32>
    %121 = math.tanh %120 : vector<4x64xf32>
    %122 = arith.mulf %118, %103 : vector<4x64xf32>
    %123 = arith.mulf %117, %121 : vector<4x64xf32>
    %124 = arith.addf %122, %123 : vector<4x64xf32>
    %125 = math.tanh %124 : vector<4x64xf32>
    %126 = arith.mulf %119, %125 : vector<4x64xf32>
    %127 = vector.extract_strided_slice %126 {offsets = [0, 0], sizes = [4, 32], strides = [1, 1]} : vector<4x64xf32> to vector<4x32xf32>
    %128 = vector.extract_strided_slice %126 {offsets = [0, 32], sizes = [4, 32], strides = [1, 1]} : vector<4x64xf32> to vector<4x32xf32>
    %cst_47 = arith.constant dense<0.000000e+00> : vector<4x256xf32>
    %129 = tpu.matmul %126, %2, %cst_47 {dimension_numbers = #tpu.dot_dimension_numbers<[1], [0], [0], [1], [0, 0, 1, 1], [], []>} : vector<4x64xf32>, vector<64x256xf32>, vector<4x256xf32> -> vector<4x256xf32>
    %130 = arith.addf %27, %129 : vector<4x256xf32>
    %cst_48 = arith.constant 5.000000e-01 : f32
    %131 = vector.broadcast %cst_48 : f32 to vector<4x256xf32>
    %132 = arith.mulf %131, %130 : vector<4x256xf32>
    %133 = math.tanh %132 : vector<4x256xf32>
    %cst_49 = arith.constant 5.000000e-01 : f32
    %134 = vector.broadcast %cst_49 : f32 to vector<4x256xf32>
    %135 = arith.mulf %134, %133 : vector<4x256xf32>
    %cst_50 = arith.constant 5.000000e-01 : f32
    %136 = vector.broadcast %cst_50 : f32 to vector<4x256xf32>
    %137 = arith.addf %135, %136 : vector<4x256xf32>
    %138 = vector.extract_strided_slice %137 {offsets = [0, 0], sizes = [4, 64], strides = [1, 1]} : vector<4x256xf32> to vector<4x64xf32>
    %139 = vector.extract_strided_slice %137 {offsets = [0, 64], sizes = [4, 64], strides = [1, 1]} : vector<4x256xf32> to vector<4x64xf32>
    %140 = vector.extract_strided_slice %137 {offsets = [0, 192], sizes = [4, 64], strides = [1, 1]} : vector<4x256xf32> to vector<4x64xf32>
    %141 = vector.extract_strided_slice %130 {offsets = [0, 128], sizes = [4, 64], strides = [1, 1]} : vector<4x256xf32> to vector<4x64xf32>
    %142 = math.tanh %141 : vector<4x64xf32>
    %143 = arith.mulf %139, %124 : vector<4x64xf32>
    %144 = arith.mulf %138, %142 : vector<4x64xf32>
    %145 = arith.addf %143, %144 : vector<4x64xf32>
    %146 = math.tanh %145 : vector<4x64xf32>
    %147 = arith.mulf %140, %146 : vector<4x64xf32>
    %148 = vector.extract_strided_slice %147 {offsets = [0, 0], sizes = [4, 32], strides = [1, 1]} : vector<4x64xf32> to vector<4x32xf32>
    %149 = vector.extract_strided_slice %147 {offsets = [0, 32], sizes = [4, 32], strides = [1, 1]} : vector<4x64xf32> to vector<4x32xf32>
    %cst_51 = arith.constant dense<0.000000e+00> : vector<4x256xf32>
    %150 = tpu.matmul %147, %2, %cst_51 {dimension_numbers = #tpu.dot_dimension_numbers<[1], [0], [0], [1], [0, 0, 1, 1], [], []>} : vector<4x64xf32>, vector<64x256xf32>, vector<4x256xf32> -> vector<4x256xf32>
    %151 = arith.addf %32, %150 : vector<4x256xf32>
    %cst_52 = arith.constant 5.000000e-01 : f32
    %152 = vector.broadcast %cst_52 : f32 to vector<4x256xf32>
    %153 = arith.mulf %152, %151 : vector<4x256xf32>
    %154 = math.tanh %153 : vector<4x256xf32>
    %cst_53 = arith.constant 5.000000e-01 : f32
    %155 = vector.broadcast %cst_53 : f32 to vector<4x256xf32>
    %156 = arith.mulf %155, %154 : vector<4x256xf32>
    %cst_54 = arith.constant 5.000000e-01 : f32
    %157 = vector.broadcast %cst_54 : f32 to vector<4x256xf32>
    %158 = arith.addf %156, %157 : vector<4x256xf32>
    %159 = vector.extract_strided_slice %158 {offsets = [0, 0], sizes = [4, 64], strides = [1, 1]} : vector<4x256xf32> to vector<4x64xf32>
    %160 = vector.extract_strided_slice %158 {offsets = [0, 64], sizes = [4, 64], strides = [1, 1]} : vector<4x256xf32> to vector<4x64xf32>
    %161 = vector.extract_strided_slice %158 {offsets = [0, 192], sizes = [4, 64], strides = [1, 1]} : vector<4x256xf32> to vector<4x64xf32>
    %162 = vector.extract_strided_slice %151 {offsets = [0, 128], sizes = [4, 64], strides = [1, 1]} : vector<4x256xf32> to vector<4x64xf32>
    %163 = math.tanh %162 : vector<4x64xf32>
    %164 = arith.mulf %160, %145 : vector<4x64xf32>
    %165 = arith.mulf %159, %163 : vector<4x64xf32>
    %166 = arith.addf %164, %165 : vector<4x64xf32>
    %167 = math.tanh %166 : vector<4x64xf32>
    %168 = arith.mulf %161, %167 : vector<4x64xf32>
    %169 = vector.extract_strided_slice %168 {offsets = [0, 0], sizes = [4, 32], strides = [1, 1]} : vector<4x64xf32> to vector<4x32xf32>
    %170 = vector.extract_strided_slice %168 {offsets = [0, 32], sizes = [4, 32], strides = [1, 1]} : vector<4x64xf32> to vector<4x32xf32>
    %cst_55 = arith.constant dense<0.000000e+00> : vector<4x256xf32>
    %171 = tpu.matmul %168, %2, %cst_55 {dimension_numbers = #tpu.dot_dimension_numbers<[1], [0], [0], [1], [0, 0, 1, 1], [], []>} : vector<4x64xf32>, vector<64x256xf32>, vector<4x256xf32> -> vector<4x256xf32>
    %172 = arith.addf %37, %171 : vector<4x256xf32>
    %cst_56 = arith.constant 5.000000e-01 : f32
    %173 = vector.broadcast %cst_56 : f32 to vector<4x256xf32>
    %174 = arith.mulf %173, %172 : vector<4x256xf32>
    %175 = math.tanh %174 : vector<4x256xf32>
    %cst_57 = arith.constant 5.000000e-01 : f32
    %176 = vector.broadcast %cst_57 : f32 to vector<4x256xf32>
    %177 = arith.mulf %176, %175 : vector<4x256xf32>
    %cst_58 = arith.constant 5.000000e-01 : f32
    %178 = vector.broadcast %cst_58 : f32 to vector<4x256xf32>
    %179 = arith.addf %177, %178 : vector<4x256xf32>
    %180 = vector.extract_strided_slice %179 {offsets = [0, 0], sizes = [4, 64], strides = [1, 1]} : vector<4x256xf32> to vector<4x64xf32>
    %181 = vector.extract_strided_slice %179 {offsets = [0, 64], sizes = [4, 64], strides = [1, 1]} : vector<4x256xf32> to vector<4x64xf32>
    %182 = vector.extract_strided_slice %179 {offsets = [0, 192], sizes = [4, 64], strides = [1, 1]} : vector<4x256xf32> to vector<4x64xf32>
    %183 = vector.extract_strided_slice %172 {offsets = [0, 128], sizes = [4, 64], strides = [1, 1]} : vector<4x256xf32> to vector<4x64xf32>
    %184 = math.tanh %183 : vector<4x64xf32>
    %185 = arith.mulf %181, %166 : vector<4x64xf32>
    %186 = arith.mulf %180, %184 : vector<4x64xf32>
    %187 = arith.addf %185, %186 : vector<4x64xf32>
    %188 = math.tanh %187 : vector<4x64xf32>
    %189 = arith.mulf %182, %188 : vector<4x64xf32>
    %190 = vector.extract_strided_slice %189 {offsets = [0, 0], sizes = [4, 32], strides = [1, 1]} : vector<4x64xf32> to vector<4x32xf32>
    %191 = vector.extract_strided_slice %189 {offsets = [0, 32], sizes = [4, 32], strides = [1, 1]} : vector<4x64xf32> to vector<4x32xf32>
    %cst_59 = arith.constant dense<0.000000e+00> : vector<4x256xf32>
    %192 = tpu.matmul %189, %2, %cst_59 {dimension_numbers = #tpu.dot_dimension_numbers<[1], [0], [0], [1], [0, 0, 1, 1], [], []>} : vector<4x64xf32>, vector<64x256xf32>, vector<4x256xf32> -> vector<4x256xf32>
    %193 = arith.addf %42, %192 : vector<4x256xf32>
    %cst_60 = arith.constant 5.000000e-01 : f32
    %194 = vector.broadcast %cst_60 : f32 to vector<4x256xf32>
    %195 = arith.mulf %194, %193 : vector<4x256xf32>
    %196 = math.tanh %195 : vector<4x256xf32>
    %cst_61 = arith.constant 5.000000e-01 : f32
    %197 = vector.broadcast %cst_61 : f32 to vector<4x256xf32>
    %198 = arith.mulf %197, %196 : vector<4x256xf32>
    %cst_62 = arith.constant 5.000000e-01 : f32
    %199 = vector.broadcast %cst_62 : f32 to vector<4x256xf32>
    %200 = arith.addf %198, %199 : vector<4x256xf32>
    %201 = vector.extract_strided_slice %200 {offsets = [0, 0], sizes = [4, 64], strides = [1, 1]} : vector<4x256xf32> to vector<4x64xf32>
    %202 = vector.extract_strided_slice %200 {offsets = [0, 64], sizes = [4, 64], strides = [1, 1]} : vector<4x256xf32> to vector<4x64xf32>
    %203 = vector.extract_strided_slice %200 {offsets = [0, 192], sizes = [4, 64], strides = [1, 1]} : vector<4x256xf32> to vector<4x64xf32>
    %204 = vector.extract_strided_slice %193 {offsets = [0, 128], sizes = [4, 64], strides = [1, 1]} : vector<4x256xf32> to vector<4x64xf32>
    %205 = math.tanh %204 : vector<4x64xf32>
    %206 = arith.mulf %202, %187 : vector<4x64xf32>
    %207 = arith.mulf %201, %205 : vector<4x64xf32>
    %208 = arith.addf %206, %207 : vector<4x64xf32>
    %209 = math.tanh %208 : vector<4x64xf32>
    %210 = arith.mulf %203, %209 : vector<4x64xf32>
    %211 = vector.extract_strided_slice %210 {offsets = [0, 0], sizes = [4, 32], strides = [1, 1]} : vector<4x64xf32> to vector<4x32xf32>
    %212 = vector.extract_strided_slice %210 {offsets = [0, 32], sizes = [4, 32], strides = [1, 1]} : vector<4x64xf32> to vector<4x32xf32>
    %c0_63 = arith.constant 0 : index
    %c0_64 = arith.constant 0 : index
    %213 = vector.load %arg5[%c0_63, %c0_64] : memref<32x128xf32, #tpu.memory_space<vmem>>, vector<32x128xf32>
    %c0_65 = arith.constant 0 : index
    %c0_66 = arith.constant 0 : index
    %214 = vector.load %arg6[%c0_65, %c0_66] : memref<32x128xf32, #tpu.memory_space<vmem>>, vector<32x128xf32>
    %c0_67 = arith.constant 0 : index
    %c0_68 = arith.constant 0 : index
    %215 = vector.load %arg7[%c0_67, %c0_68] : memref<1x128xf32, #tpu.memory_space<vmem>>, vector<1x128xf32>
    %cst_69 = arith.constant dense<0.000000e+00> : vector<4x128xf32>
    %216 = tpu.matmul %64, %213, %cst_69 {dimension_numbers = #tpu.dot_dimension_numbers<[1], [0], [0], [1], [0, 0, 1, 1], [], []>} : vector<4x32xf32>, vector<32x128xf32>, vector<4x128xf32> -> vector<4x128xf32>
    %cst_70 = arith.constant dense<0.000000e+00> : vector<4x128xf32>
    %217 = tpu.matmul %212, %214, %cst_70 {dimension_numbers = #tpu.dot_dimension_numbers<[1], [0], [0], [1], [0, 0, 1, 1], [], []>} : vector<4x32xf32>, vector<32x128xf32>, vector<4x128xf32> -> vector<4x128xf32>
    %218 = arith.addf %216, %217 : vector<4x128xf32>
    %219 = vector.broadcast %215 : vector<1x128xf32> to vector<4x128xf32>
    %220 = arith.addf %218, %219 : vector<4x128xf32>
    %c0_71 = arith.constant 0 : index
    %c0_72 = arith.constant 0 : index
    %c0_73 = arith.constant 0 : index
    %221 = vector.load %arg8[%c0_71, %c0_72, %c0_73] : memref<8x4x128xf32, #tpu.memory_space<vmem>>, vector<1x4x128xf32>
    %222 = vector.shape_cast %221 : vector<1x4x128xf32> to vector<4x128xf32>
    %223 = vector.shape_cast %220 : vector<4x128xf32> to vector<1x4x128xf32>
    tpu.vector_store %arg8[%c0_71, %c0_72, %c0_73], %223 {strides = array<i32>} : memref<8x4x128xf32, #tpu.memory_space<vmem>>, vector<1x4x128xf32>,
    %cst_74 = arith.constant dense<0.000000e+00> : vector<4x128xf32>
    %224 = tpu.matmul %85, %213, %cst_74 {dimension_numbers = #tpu.dot_dimension_numbers<[1], [0], [0], [1], [0, 0, 1, 1], [], []>} : vector<4x32xf32>, vector<32x128xf32>, vector<4x128xf32> -> vector<4x128xf32>
    %cst_75 = arith.constant dense<0.000000e+00> : vector<4x128xf32>
    %225 = tpu.matmul %191, %214, %cst_75 {dimension_numbers = #tpu.dot_dimension_numbers<[1], [0], [0], [1], [0, 0, 1, 1], [], []>} : vector<4x32xf32>, vector<32x128xf32>, vector<4x128xf32> -> vector<4x128xf32>
    %226 = arith.addf %224, %225 : vector<4x128xf32>
    %227 = vector.broadcast %215 : vector<1x128xf32> to vector<4x128xf32>
    %228 = arith.addf %226, %227 : vector<4x128xf32>
    %c1_76 = arith.constant 1 : index
    %c0_77 = arith.constant 0 : index
    %c0_78 = arith.constant 0 : index
    %229 = vector.load %arg8[%c1_76, %c0_77, %c0_78] : memref<8x4x128xf32, #tpu.memory_space<vmem>>, vector<1x4x128xf32>
    %230 = vector.shape_cast %229 : vector<1x4x128xf32> to vector<4x128xf32>
    %231 = vector.shape_cast %228 : vector<4x128xf32> to vector<1x4x128xf32>
    tpu.vector_store %arg8[%c1_76, %c0_77, %c0_78], %231 {strides = array<i32>} : memref<8x4x128xf32, #tpu.memory_space<vmem>>, vector<1x4x128xf32>,
    %cst_79 = arith.constant dense<0.000000e+00> : vector<4x128xf32>
    %232 = tpu.matmul %106, %213, %cst_79 {dimension_numbers = #tpu.dot_dimension_numbers<[1], [0], [0], [1], [0, 0, 1, 1], [], []>} : vector<4x32xf32>, vector<32x128xf32>, vector<4x128xf32> -> vector<4x128xf32>
    %cst_80 = arith.constant dense<0.000000e+00> : vector<4x128xf32>
    %233 = tpu.matmul %170, %214, %cst_80 {dimension_numbers = #tpu.dot_dimension_numbers<[1], [0], [0], [1], [0, 0, 1, 1], [], []>} : vector<4x32xf32>, vector<32x128xf32>, vector<4x128xf32> -> vector<4x128xf32>
    %234 = arith.addf %232, %233 : vector<4x128xf32>
    %235 = vector.broadcast %215 : vector<1x128xf32> to vector<4x128xf32>
    %236 = arith.addf %234, %235 : vector<4x128xf32>
    %c2_81 = arith.constant 2 : index
    %c0_82 = arith.constant 0 : index
    %c0_83 = arith.constant 0 : index
    %237 = vector.load %arg8[%c2_81, %c0_82, %c0_83] : memref<8x4x128xf32, #tpu.memory_space<vmem>>, vector<1x4x128xf32>
    %238 = vector.shape_cast %237 : vector<1x4x128xf32> to vector<4x128xf32>
    %239 = vector.shape_cast %236 : vector<4x128xf32> to vector<1x4x128xf32>
    tpu.vector_store %arg8[%c2_81, %c0_82, %c0_83], %239 {strides = array<i32>} : memref<8x4x128xf32, #tpu.memory_space<vmem>>, vector<1x4x128xf32>,
    %cst_84 = arith.constant dense<0.000000e+00> : vector<4x128xf32>
    %240 = tpu.matmul %127, %213, %cst_84 {dimension_numbers = #tpu.dot_dimension_numbers<[1], [0], [0], [1], [0, 0, 1, 1], [], []>} : vector<4x32xf32>, vector<32x128xf32>, vector<4x128xf32> -> vector<4x128xf32>
    %cst_85 = arith.constant dense<0.000000e+00> : vector<4x128xf32>
    %241 = tpu.matmul %149, %214, %cst_85 {dimension_numbers = #tpu.dot_dimension_numbers<[1], [0], [0], [1], [0, 0, 1, 1], [], []>} : vector<4x32xf32>, vector<32x128xf32>, vector<4x128xf32> -> vector<4x128xf32>
    %242 = arith.addf %240, %241 : vector<4x128xf32>
    %243 = vector.broadcast %215 : vector<1x128xf32> to vector<4x128xf32>
    %244 = arith.addf %242, %243 : vector<4x128xf32>
    %c3_86 = arith.constant 3 : index
    %c0_87 = arith.constant 0 : index
    %c0_88 = arith.constant 0 : index
    %245 = vector.load %arg8[%c3_86, %c0_87, %c0_88] : memref<8x4x128xf32, #tpu.memory_space<vmem>>, vector<1x4x128xf32>
    %246 = vector.shape_cast %245 : vector<1x4x128xf32> to vector<4x128xf32>
    %247 = vector.shape_cast %244 : vector<4x128xf32> to vector<1x4x128xf32>
    tpu.vector_store %arg8[%c3_86, %c0_87, %c0_88], %247 {strides = array<i32>} : memref<8x4x128xf32, #tpu.memory_space<vmem>>, vector<1x4x128xf32>,
    %cst_89 = arith.constant dense<0.000000e+00> : vector<4x128xf32>
    %248 = tpu.matmul %148, %213, %cst_89 {dimension_numbers = #tpu.dot_dimension_numbers<[1], [0], [0], [1], [0, 0, 1, 1], [], []>} : vector<4x32xf32>, vector<32x128xf32>, vector<4x128xf32> -> vector<4x128xf32>
    %cst_90 = arith.constant dense<0.000000e+00> : vector<4x128xf32>
    %249 = tpu.matmul %128, %214, %cst_90 {dimension_numbers = #tpu.dot_dimension_numbers<[1], [0], [0], [1], [0, 0, 1, 1], [], []>} : vector<4x32xf32>, vector<32x128xf32>, vector<4x128xf32> -> vector<4x128xf32>
    %250 = arith.addf %248, %249 : vector<4x128xf32>
    %251 = vector.broadcast %215 : vector<1x128xf32> to vector<4x128xf32>
    %252 = arith.addf %250, %251 : vector<4x128xf32>
    %c4_91 = arith.constant 4 : index
    %c0_92 = arith.constant 0 : index
    %c0_93 = arith.constant 0 : index
    %253 = vector.load %arg8[%c4_91, %c0_92, %c0_93] : memref<8x4x128xf32, #tpu.memory_space<vmem>>, vector<1x4x128xf32>
    %254 = vector.shape_cast %253 : vector<1x4x128xf32> to vector<4x128xf32>
    %255 = vector.shape_cast %252 : vector<4x128xf32> to vector<1x4x128xf32>
    tpu.vector_store %arg8[%c4_91, %c0_92, %c0_93], %255 {strides = array<i32>} : memref<8x4x128xf32, #tpu.memory_space<vmem>>, vector<1x4x128xf32>,
    %cst_94 = arith.constant dense<0.000000e+00> : vector<4x128xf32>
    %256 = tpu.matmul %169, %213, %cst_94 {dimension_numbers = #tpu.dot_dimension_numbers<[1], [0], [0], [1], [0, 0, 1, 1], [], []>} : vector<4x32xf32>, vector<32x128xf32>, vector<4x128xf32> -> vector<4x128xf32>
    %cst_95 = arith.constant dense<0.000000e+00> : vector<4x128xf32>
    %257 = tpu.matmul %107, %214, %cst_95 {dimension_numbers = #tpu.dot_dimension_numbers<[1], [0], [0], [1], [0, 0, 1, 1], [], []>} : vector<4x32xf32>, vector<32x128xf32>, vector<4x128xf32> -> vector<4x128xf32>
    %258 = arith.addf %256, %257 : vector<4x128xf32>
    %259 = vector.broadcast %215 : vector<1x128xf32> to vector<4x128xf32>
    %260 = arith.addf %258, %259 : vector<4x128xf32>
    %c5_96 = arith.constant 5 : index
    %c0_97 = arith.constant 0 : index
    %c0_98 = arith.constant 0 : index
    %261 = vector.load %arg8[%c5_96, %c0_97, %c0_98] : memref<8x4x128xf32, #tpu.memory_space<vmem>>, vector<1x4x128xf32>
    %262 = vector.shape_cast %261 : vector<1x4x128xf32> to vector<4x128xf32>
    %263 = vector.shape_cast %260 : vector<4x128xf32> to vector<1x4x128xf32>
    tpu.vector_store %arg8[%c5_96, %c0_97, %c0_98], %263 {strides = array<i32>} : memref<8x4x128xf32, #tpu.memory_space<vmem>>, vector<1x4x128xf32>,
    %cst_99 = arith.constant dense<0.000000e+00> : vector<4x128xf32>
    %264 = tpu.matmul %190, %213, %cst_99 {dimension_numbers = #tpu.dot_dimension_numbers<[1], [0], [0], [1], [0, 0, 1, 1], [], []>} : vector<4x32xf32>, vector<32x128xf32>, vector<4x128xf32> -> vector<4x128xf32>
    %cst_100 = arith.constant dense<0.000000e+00> : vector<4x128xf32>
    %265 = tpu.matmul %86, %214, %cst_100 {dimension_numbers = #tpu.dot_dimension_numbers<[1], [0], [0], [1], [0, 0, 1, 1], [], []>} : vector<4x32xf32>, vector<32x128xf32>, vector<4x128xf32> -> vector<4x128xf32>
    %266 = arith.addf %264, %265 : vector<4x128xf32>
    %267 = vector.broadcast %215 : vector<1x128xf32> to vector<4x128xf32>
    %268 = arith.addf %266, %267 : vector<4x128xf32>
    %c6_101 = arith.constant 6 : index
    %c0_102 = arith.constant 0 : index
    %c0_103 = arith.constant 0 : index
    %269 = vector.load %arg8[%c6_101, %c0_102, %c0_103] : memref<8x4x128xf32, #tpu.memory_space<vmem>>, vector<1x4x128xf32>
    %270 = vector.shape_cast %269 : vector<1x4x128xf32> to vector<4x128xf32>
    %271 = vector.shape_cast %268 : vector<4x128xf32> to vector<1x4x128xf32>
    tpu.vector_store %arg8[%c6_101, %c0_102, %c0_103], %271 {strides = array<i32>} : memref<8x4x128xf32, #tpu.memory_space<vmem>>, vector<1x4x128xf32>,
    %cst_104 = arith.constant dense<0.000000e+00> : vector<4x128xf32>
    %272 = tpu.matmul %211, %213, %cst_104 {dimension_numbers = #tpu.dot_dimension_numbers<[1], [0], [0], [1], [0, 0, 1, 1], [], []>} : vector<4x32xf32>, vector<32x128xf32>, vector<4x128xf32> -> vector<4x128xf32>
    %cst_105 = arith.constant dense<0.000000e+00> : vector<4x128xf32>
    %273 = tpu.matmul %65, %214, %cst_105 {dimension_numbers = #tpu.dot_dimension_numbers<[1], [0], [0], [1], [0, 0, 1, 1], [], []>} : vector<4x32xf32>, vector<32x128xf32>, vector<4x128xf32> -> vector<4x128xf32>
    %274 = arith.addf %272, %273 : vector<4x128xf32>
    %275 = vector.broadcast %215 : vector<1x128xf32> to vector<4x128xf32>
    %276 = arith.addf %274, %275 : vector<4x128xf32>
    %c7_106 = arith.constant 7 : index
    %c0_107 = arith.constant 0 : index
    %c0_108 = arith.constant 0 : index
    %277 = vector.load %arg8[%c7_106, %c0_107, %c0_108] : memref<8x4x128xf32, #tpu.memory_space<vmem>>, vector<1x4x128xf32>
    %278 = vector.shape_cast %277 : vector<1x4x128xf32> to vector<4x128xf32>
    %279 = vector.shape_cast %276 : vector<4x128xf32> to vector<1x4x128xf32>
    tpu.vector_store %arg8[%c7_106, %c0_107, %c0_108], %279 {strides = array<i32>} : memref<8x4x128xf32, #tpu.memory_space<vmem>>, vector<1x4x128xf32>,
    return
  }
  func.func @transform_0(%arg0: i32) -> (i32, i32, i32) {
    %c0_i32 = arith.constant 0 : i32
    %c0_i32_0 = arith.constant 0 : i32
    %c0_i32_1 = arith.constant 0 : i32
    return %c0_i32, %arg0, %c0_i32_0 : i32, i32, i32
  }
  func.func @transform_1(%arg0: i32) -> (i32, i32) {
    %c0_i32 = arith.constant 0 : i32
    %c0_i32_0 = arith.constant 0 : i32
    %c0_i32_1 = arith.constant 0 : i32
    return %c0_i32, %c0_i32_0 : i32, i32
  }
  func.func @transform_2(%arg0: i32) -> (i32, i32) {
    %c0_i32 = arith.constant 0 : i32
    %c0_i32_0 = arith.constant 0 : i32
    %c0_i32_1 = arith.constant 0 : i32
    return %c0_i32, %c0_i32_0 : i32, i32
  }
  func.func @transform_3(%arg0: i32) -> (i32, i32) {
    %c0_i32 = arith.constant 0 : i32
    %c0_i32_0 = arith.constant 0 : i32
    %c0_i32_1 = arith.constant 0 : i32
    return %c0_i32, %c0_i32_0 : i32, i32
  }
  func.func @transform_4(%arg0: i32) -> (i32, i32) {
    %c0_i32 = arith.constant 0 : i32
    %c0_i32_0 = arith.constant 0 : i32
    %c0_i32_1 = arith.constant 0 : i32
    return %c0_i32, %c0_i32_0 : i32, i32
  }
  func.func @transform_5(%arg0: i32) -> (i32, i32) {
    %c0_i32 = arith.constant 0 : i32
    %c0_i32_0 = arith.constant 0 : i32
    %c0_i32_1 = arith.constant 0 : i32
    return %c0_i32, %c0_i32_0 : i32, i32
  }
  func.func @transform_6(%arg0: i32) -> (i32, i32) {
    %c0_i32 = arith.constant 0 : i32
    %c0_i32_0 = arith.constant 0 : i32
    %c0_i32_1 = arith.constant 0 : i32
    return %c0_i32, %c0_i32_0 : i32, i32
  }
  func.func @transform_7(%arg0: i32) -> (i32, i32, i32) {
    %c0_i32 = arith.constant 0 : i32
    %c0_i32_0 = arith.constant 0 : i32
    %c0_i32_1 = arith.constant 0 : i32
    return %c0_i32, %arg0, %c0_i32_0 : i32, i32, i32
  }
}

</mosaic_0001>

<llo_original>
// kernel: tagger_forward_batched.1
$region0: #{tagger_forward_batched.1}
  #allocation0 [shape = 'u32[]', space=smem, size = 0x4, offset = 0x4, fixed_abs, tag = 'smem constant byte address 0x4 - core index']
  #allocation1 [shape = 'u32[72,128]{1,0:T(1,128)}', space=vmem, size = 0x9000, scoped, tag = 'internal scratch']
  %s0 = inlined_call_operand.vmem [shape: f32[8,4,64], index: 0, kind: input, shape index: {}]
  %s1 = inlined_call_operand.vmem [shape: f32[64,256], index: 1, kind: input, shape index: {}]
  %s2 = inlined_call_operand.vmem [shape: f32[1,256], index: 2, kind: input, shape index: {}]
  %s3 = inlined_call_operand.vmem [shape: f32[64,256], index: 3, kind: input, shape index: {}]
  %s4 = inlined_call_operand.vmem [shape: f32[32,128], index: 4, kind: input, shape index: {}]
  %s5 = inlined_call_operand.vmem [shape: f32[32,128], index: 5, kind: input, shape index: {}]
  %s6 = inlined_call_operand.vmem [shape: f32[1,128], index: 6, kind: input, shape index: {}]
  %s7 = inlined_call_operand.vmem [shape: f32[8,4,128], index: 7, kind: output, shape index: {}]
  %s8 = sld [smem:[#allocation0]]
  $region38: #{tagger_forward_batched.1} parent=0
    _
  %s10 = ssub.s32 1, %s8
  %s11 = scalar_select 0, %s10, %s8
  // Predicated region
  $region2: #{tagger_forward_batched.1} parent=0 // pred_check
    _
  $region3: #{tagger_forward_batched.1} parent=0 // pred_check_branch
    %13 = sbr.rel (0) target = $region5
  $region4: #{tagger_forward_batched.1} parent=0 // pred_region
    _
  $region5: #{tagger_forward_batched.1} parent=0 // pred_fallthru
    _
  // Predicated region
  $region6: #{tagger_forward_batched.1} parent=0 // pred_check
    _
  $region7: #{tagger_forward_batched.1} parent=0 // pred_check_branch
    %15 = sbr.rel (0) target = $region9
  $region8: #{tagger_forward_batched.1} parent=0 // pred_region
    _
  $region9: #{tagger_forward_batched.1} parent=0 // pred_fallthru
    _
  // Predicated region
  $region10: #{tagger_forward_batched.1} parent=0 // pred_check
    _
  $region11: #{tagger_forward_batched.1} parent=0 // pred_check_branch
    %17 = sbr.rel (0) target = $region13
  $region12: #{tagger_forward_batched.1} parent=0 // pred_region
    _
  $region13: #{tagger_forward_batched.1} parent=0 // pred_fallthru
    _
  // Predicated region
  $region14: #{tagger_forward_batched.1} parent=0 // pred_check
    _
  $region15: #{tagger_forward_batched.1} parent=0 // pred_check_branch
    %19 = sbr.rel (0) target = $region17
  $region16: #{tagger_forward_batched.1} parent=0 // pred_region
    _
  $region17: #{tagger_forward_batched.1} parent=0 // pred_fallthru
    _
  // Predicated region
  $region18: #{tagger_forward_batched.1} parent=0 // pred_check
    _
  $region19: #{tagger_forward_batched.1} parent=0 // pred_check_branch
    %21 = sbr.rel (0) target = $region21
  $region20: #{tagger_forward_batched.1} parent=0 // pred_region
    _
  $region21: #{tagger_forward_batched.1} parent=0 // pred_fallthru
    _
  // Predicated region
  $region22: #{tagger_forward_batched.1} parent=0 // pred_check
    _
  $region23: #{tagger_forward_batched.1} parent=0 // pred_check_branch
    %23 = sbr.rel (0) target = $region25
  $region24: #{tagger_forward_batched.1} parent=0 // pred_region
    _
  $region25: #{tagger_forward_batched.1} parent=0 // pred_fallthru
    _
  // Predicated region
  $region26: #{tagger_forward_batched.1} parent=0 // pred_check
    _
  $region27: #{tagger_forward_batched.1} parent=0 // pred_check_branch
    %25 = sbr.rel (0) target = $region29
  $region28: #{tagger_forward_batched.1} parent=0 // pred_region
    _
  $region29: #{tagger_forward_batched.1} parent=0 // pred_fallthru
    _
  %v26 = vld [vmem:[%s1] sm:$0xff]
  %v27 = vld [vmem:[%s1 + $0x8] sm:$0xff]
  %v28 = vld [vmem:[%s1 + $0x10] sm:$0xff]
  %v29 = vld [vmem:[%s1 + $0x18] sm:$0xff]
  %v30 = vld [vmem:[%s1 + $0x20] sm:$0xff]
  %v31 = vld [vmem:[%s1 + $0x28] sm:$0xff]
  %v32 = vld [vmem:[%s1 + $0x30] sm:$0xff]
  %v33 = vld [vmem:[%s1 + $0x38] sm:$0xff]
  %v34 = vld [vmem:[%s1 + $0x40] sm:$0xff]
  %v35 = vld [vmem:[%s1 + $0x48] sm:$0xff]
  %v36 = vld [vmem:[%s1 + $0x50] sm:$0xff]
  %v37 = vld [vmem:[%s1 + $0x58] sm:$0xff]
  %v38 = vld [vmem:[%s1 + $0x60] sm:$0xff]
  %v39 = vld [vmem:[%s1 + $0x68] sm:$0xff]
  %v40 = vld [vmem:[%s1 + $0x70] sm:$0xff]
  %v41 = vld [vmem:[%s1 + $0x78] sm:$0xff]
  %v42 = vld [vmem:[%s2] sm:$0x3]
  %v43 = vld [vmem:[%s3] sm:$0xff]
  %v44 = vld [vmem:[%s3 + $0x8] sm:$0xff]
  %v45 = vld [vmem:[%s3 + $0x10] sm:$0xff]
  %v46 = vld [vmem:[%s3 + $0x18] sm:$0xff]
  %v47 = vld [vmem:[%s3 + $0x20] sm:$0xff]
  %v48 = vld [vmem:[%s3 + $0x28] sm:$0xff]
  %v49 = vld [vmem:[%s3 + $0x30] sm:$0xff]
  %v50 = vld [vmem:[%s3 + $0x38] sm:$0xff]
  %v51 = vld [vmem:[%s3 + $0x40] sm:$0xff]
  %v52 = vld [vmem:[%s3 + $0x48] sm:$0xff]
  %v53 = vld [vmem:[%s3 + $0x50] sm:$0xff]
  %v54 = vld [vmem:[%s3 + $0x58] sm:$0xff]
  %v55 = vld [vmem:[%s3 + $0x60] sm:$0xff]
  %v56 = vld [vmem:[%s3 + $0x68] sm:$0xff]
  %v57 = vld [vmem:[%s3 + $0x70] sm:$0xff]
  %v58 = vld [vmem:[%s3 + $0x78] sm:$0xff]
  %v59 = vld [vmem:[%s0] sm:$0xf]
  %v61 = vperm.slane %v42, 0
  %v62 = vperm.slane %v42, 1
  %vm65 = vcmask 523264
  %v67 = vsel %vm65, %v59, 0
  %69 = vmatpush.msra.mxu0 0.0
  %70 = vmatpush.msra.mxu0 0.0
  %71 = vmatpush.msra.mxu0 0.0
  %72 = vmatpush.msra.mxu0 0.0
  %73 = vmatpush.msra.mxu0 0.0
  %74 = vmatpush.msra.mxu0 0.0
  %75 = vmatpush.msra.mxu0 0.0
  %76 = vmatpush.msra.mxu0 0.0
  %77 = vmatpush.msra.mxu0 %v40
  %78 = vmatpush.msra.mxu0 %v38
  %79 = vmatpush.msra.mxu0 %v36
  %80 = vmatpush.msra.mxu0 %v34
  %81 = vmatpush.msra.mxu0 %v32
  %82 = vmatpush.msra.mxu0 %v30
  %83 = vmatpush.msra.mxu0 %v28
  %84 = vmatpush.msra.mxu0 %v26
  %85 = vmatmul.f32.gmra.mxu0 %v67
  %v86 = vpop.f32.mrf.mxu0
  %v87 = vadd.f32 %v61, %v86
  %88 = vdwg.mxu0
  %89 = vmatpush.msra.mxu0 0.0
  %90 = vmatpush.msra.mxu0 0.0
  %91 = vmatpush.msra.mxu0 0.0
  %92 = vmatpush.msra.mxu0 0.0
  %93 = vmatpush.msra.mxu0 0.0
  %94 = vmatpush.msra.mxu0 0.0
  %95 = vmatpush.msra.mxu0 0.0
  %96 = vmatpush.msra.mxu0 0.0
  %97 = vmatpush.msra.mxu0 %v41
  %98 = vmatpush.msra.mxu0 %v39
  %99 = vmatpush.msra.mxu0 %v37
  %100 = vmatpush.msra.mxu0 %v35
  %101 = vmatpush.msra.mxu0 %v33
  %102 = vmatpush.msra.mxu0 %v31
  %103 = vmatpush.msra.mxu0 %v29
  %104 = vmatpush.msra.mxu0 %v27
  %105 = vmatmul.f32.gmra.mxu0 %v67
  %v106 = vpop.f32.mrf.mxu0
  %v107 = vadd.f32 %v62, %v106
  %108 = vdwg.mxu0
  %s109 = scalar_lea.vmem %s0, 4
  %v110 = vld [vmem:[%s109] sm:$0xf]
  %v112 = vsel %vm65, %v110, 0
  %114 = vmatpush.msra.mxu0 0.0
  %115 = vmatpush.msra.mxu0 0.0
  %116 = vmatpush.msra.mxu0 0.0
  %117 = vmatpush.msra.mxu0 0.0
  %118 = vmatpush.msra.mxu0 0.0
  %119 = vmatpush.msra.mxu0 0.0
  %120 = vmatpush.msra.mxu0 0.0
  %121 = vmatpush.msra.mxu0 0.0
  %122 = vmatpush.msra.mxu0 %v40
  %123 = vmatpush.msra.mxu0 %v38
  %124 = vmatpush.msra.mxu0 %v36
  %125 = vmatpush.msra.mxu0 %v34
  %126 = vmatpush.msra.mxu0 %v32
  %127 = vmatpush.msra.mxu0 %v30
  %128 = vmatpush.msra.mxu0 %v28
  %129 = vmatpush.msra.mxu0 %v26
  %130 = vmatmul.f32.gmra.mxu0 %v112
  %v131 = vpop.f32.mrf.mxu0
  %v132 = vadd.f32 %v61, %v131
  %133 = vdwg.mxu0
  %134 = vmatpush.msra.mxu0 0.0
  %135 = vmatpush.msra.mxu0 0.0
  %136 = vmatpush.msra.mxu0 0.0
  %137 = vmatpush.msra.mxu0 0.0
  %138 = vmatpush.msra.mxu0 0.0
  %139 = vmatpush.msra.mxu0 0.0
  %140 = vmatpush.msra.mxu0 0.0
  %141 = vmatpush.msra.mxu0 0.0
  %142 = vmatpush.msra.mxu0 %v41
  %143 = vmatpush.msra.mxu0 %v39
  %144 = vmatpush.msra.mxu0 %v37
  %145 = vmatpush.msra.mxu0 %v35
  %146 = vmatpush.msra.mxu0 %v33
  %147 = vmatpush.msra.mxu0 %v31
  %148 = vmatpush.msra.mxu0 %v29
  %149 = vmatpush.msra.mxu0 %v27
  %150 = vmatmul.f32.gmra.mxu0 %v112
  %v151 = vpop.f32.mrf.mxu0
  %v152 = vadd.f32 %v62, %v151
  %153 = vdwg.mxu0
  %s154 = scalar_lea.vmem %s0, 8
  %v155 = vld [vmem:[%s154] sm:$0xf]
  %v157 = vsel %vm65, %v155, 0
  %159 = vmatpush.msra.mxu0 0.0
  %160 = vmatpush.msra.mxu0 0.0
  %161 = vmatpush.msra.mxu0 0.0
  %162 = vmatpush.msra.mxu0 0.0
  %163 = vmatpush.msra.mxu0 0.0
  %164 = vmatpush.msra.mxu0 0.0
  %165 = vmatpush.msra.mxu0 0.0
  %166 = vmatpush.msra.mxu0 0.0
  %167 = vmatpush.msra.mxu0 %v40
  %168 = vmatpush.msra.mxu0 %v38
  %169 = vmatpush.msra.mxu0 %v36
  %170 = vmatpush.msra.mxu0 %v34
  %171 = vmatpush.msra.mxu0 %v32
  %172 = vmatpush.msra.mxu0 %v30
  %173 = vmatpush.msra.mxu0 %v28
  %174 = vmatpush.msra.mxu0 %v26
  %175 = vmatmul.f32.gmra.mxu0 %v157
  %v176 = vpop.f32.mrf.mxu0
  %v177 = vadd.f32 %v61, %v176
  %178 = vdwg.mxu0
  %179 = vmatpush.msra.mxu0 0.0
  %180 = vmatpush.msra.mxu0 0.0
  %181 = vmatpush.msra.mxu0 0.0
  %182 = vmatpush.msra.mxu0 0.0
  %183 = vmatpush.msra.mxu0 0.0
  %184 = vmatpush.msra.mxu0 0.0
  %185 = vmatpush.msra.mxu0 0.0
  %186 = vmatpush.msra.mxu0 0.0
  %187 = vmatpush.msra.mxu0 %v41
  %188 = vmatpush.msra.mxu0 %v39
  %189 = vmatpush.msra.mxu0 %v37
  %190 = vmatpush.msra.mxu0 %v35
  %191 = vmatpush.msra.mxu0 %v33
  %192 = vmatpush.msra.mxu0 %v31
  %193 = vmatpush.msra.mxu0 %v29
  %194 = vmatpush.msra.mxu0 %v27
  %195 = vmatmul.f32.gmra.mxu0 %v157
  %v196 = vpop.f32.mrf.mxu0
  %v197 = vadd.f32 %v62, %v196
  %198 = vdwg.mxu0
  %s199 = scalar_lea.vmem %s0, 12
  %v200 = vld [vmem:[%s199] sm:$0xf]
  %v202 = vsel %vm65, %v200, 0
  %204 = vmatpush.msra.mxu0 0.0
  %205 = vmatpush.msra.mxu0 0.0
  %206 = vmatpush.msra.mxu0 0.0
  %207 = vmatpush.msra.mxu0 0.0
  %208 = vmatpush.msra.mxu0 0.0
  %209 = vmatpush.msra.mxu0 0.0
  %210 = vmatpush.msra.mxu0 0.0
  %211 = vmatpush.msra.mxu0 0.0
  %212 = vmatpush.msra.mxu0 %v40
  %213 = vmatpush.msra.mxu0 %v38
  %214 = vmatpush.msra.mxu0 %v36
  %215 = vmatpush.msra.mxu0 %v34
  %216 = vmatpush.msra.mxu0 %v32
  %217 = vmatpush.msra.mxu0 %v30
  %218 = vmatpush.msra.mxu0 %v28
  %219 = vmatpush.msra.mxu0 %v26
  %220 = vmatmul.f32.gmra.mxu0 %v202
  %v221 = vpop.f32.mrf.mxu0
  %v222 = vadd.f32 %v61, %v221
  %223 = vdwg.mxu0
  %224 = vmatpush.msra.mxu0 0.0
  %225 = vmatpush.msra.mxu0 0.0
  %226 = vmatpush.msra.mxu0 0.0
  %227 = vmatpush.msra.mxu0 0.0
  %228 = vmatpush.msra.mxu0 0.0
  %229 = vmatpush.msra.mxu0 0.0
  %230 = vmatpush.msra.mxu0 0.0
  %231 = vmatpush.msra.mxu0 0.0
  %232 = vmatpush.msra.mxu0 %v41
  %233 = vmatpush.msra.mxu0 %v39
  %234 = vmatpush.msra.mxu0 %v37
  %235 = vmatpush.msra.mxu0 %v35
  %236 = vmatpush.msra.mxu0 %v33
  %237 = vmatpush.msra.mxu0 %v31
  %238 = vmatpush.msra.mxu0 %v29
  %239 = vmatpush.msra.mxu0 %v27
  %240 = vmatmul.f32.gmra.mxu0 %v202
  %v241 = vpop.f32.mrf.mxu0
  %v242 = vadd.f32 %v62, %v241
  %243 = vdwg.mxu0
  %s244 = scalar_lea.vmem %s0, 16
  %v245 = vld [vmem:[%s244] sm:$0xf]
  %v247 = vsel %vm65, %v245, 0
  %249 = vmatpush.msra.mxu0 0.0
  %250 = vmatpush.msra.mxu0 0.0
  %251 = vmatpush.msra.mxu0 0.0
  %252 = vmatpush.msra.mxu0 0.0
  %253 = vmatpush.msra.mxu0 0.0
  %254 = vmatpush.msra.mxu0 0.0
  %255 = vmatpush.msra.mxu0 0.0
  %256 = vmatpush.msra.mxu0 0.0
  %257 = vmatpush.msra.mxu0 %v40
  %258 = vmatpush.msra.mxu0 %v38
  %259 = vmatpush.msra.mxu0 %v36
  %260 = vmatpush.msra.mxu0 %v34
  %261 = vmatpush.msra.mxu0 %v32
  %262 = vmatpush.msra.mxu0 %v30
  %263 = vmatpush.msra.mxu0 %v28
  %264 = vmatpush.msra.mxu0 %v26
  %265 = vmatmul.f32.gmra.mxu0 %v247
  %v266 = vpop.f32.mrf.mxu0
  %v267 = vadd.f32 %v61, %v266
  %268 = vdwg.mxu0
  %269 = vmatpush.msra.mxu0 0.0
  %270 = vmatpush.msra.mxu0 0.0
  %271 = vmatpush.msra.mxu0 0.0
  %272 = vmatpush.msra.mxu0 0.0
  %273 = vmatpush.msra.mxu0 0.0
  %274 = vmatpush.msra.mxu0 0.0
  %275 = vmatpush.msra.mxu0 0.0
  %276 = vmatpush.msra.mxu0 0.0
  %277 = vmatpush.msra.mxu0 %v41
  %278 = vmatpush.msra.mxu0 %v39
  %279 = vmatpush.msra.mxu0 %v37
  %280 = vmatpush.msra.mxu0 %v35
  %281 = vmatpush.msra.mxu0 %v33
  %282 = vmatpush.msra.mxu0 %v31
  %283 = vmatpush.msra.mxu0 %v29
  %284 = vmatpush.msra.mxu0 %v27
  %285 = vmatmul.f32.gmra.mxu0 %v247
  %v286 = vpop.f32.mrf.mxu0
  %v287 = vadd.f32 %v62, %v286
  %288 = vdwg.mxu0
  %s289 = scalar_lea.vmem %s0, 20
  %v290 = vld [vmem:[%s289] sm:$0xf]
  %v292 = vsel %vm65, %v290, 0
  %294 = vmatpush.msra.mxu0 0.0
  %295 = vmatpush.msra.mxu0 0.0
  %296 = vmatpush.msra.mxu0 0.0
  %297 = vmatpush.msra.mxu0 0.0
  %298 = vmatpush.msra.mxu0 0.0
  %299 = vmatpush.msra.mxu0 0.0
  %300 = vmatpush.msra.mxu0 0.0
  %301 = vmatpush.msra.mxu0 0.0
  %302 = vmatpush.msra.mxu0 %v40
  %303 = vmatpush.msra.mxu0 %v38
  %304 = vmatpush.msra.mxu0 %v36
  %305 = vmatpush.msra.mxu0 %v34
  %306 = vmatpush.msra.mxu0 %v32
  %307 = vmatpush.msra.mxu0 %v30
  %308 = vmatpush.msra.mxu0 %v28
  %309 = vmatpush.msra.mxu0 %v26
  %310 = vmatmul.f32.gmra.mxu0 %v292
  %v311 = vpop.f32.mrf.mxu0
  %v312 = vadd.f32 %v61, %v311
  %313 = vdwg.mxu0
  %314 = vmatpush.msra.mxu0 0.0
  %315 = vmatpush.msra.mxu0 0.0
  %316 = vmatpush.msra.mxu0 0.0
  %317 = vmatpush.msra.mxu0 0.0
  %318 = vmatpush.msra.mxu0 0.0
  %319 = vmatpush.msra.mxu0 0.0
  %320 = vmatpush.msra.mxu0 0.0
  %321 = vmatpush.msra.mxu0 0.0
  %322 = vmatpush.msra.mxu0 %v41
  %323 = vmatpush.msra.mxu0 %v39
  %324 = vmatpush.msra.mxu0 %v37
  %325 = vmatpush.msra.mxu0 %v35
  %326 = vmatpush.msra.mxu0 %v33
  %327 = vmatpush.msra.mxu0 %v31
  %328 = vmatpush.msra.mxu0 %v29
  %329 = vmatpush.msra.mxu0 %v27
  %330 = vmatmul.f32.gmra.mxu0 %v292
  %v331 = vpop.f32.mrf.mxu0
  %v332 = vadd.f32 %v62, %v331
  %333 = vdwg.mxu0
  %s334 = scalar_lea.vmem %s0, 24
  %v335 = vld [vmem:[%s334] sm:$0xf]
  %v337 = vsel %vm65, %v335, 0
  %339 = vmatpush.msra.mxu0 0.0
  %340 = vmatpush.msra.mxu0 0.0
  %341 = vmatpush.msra.mxu0 0.0
  %342 = vmatpush.msra.mxu0 0.0
  %343 = vmatpush.msra.mxu0 0.0
  %344 = vmatpush.msra.mxu0 0.0
  %345 = vmatpush.msra.mxu0 0.0
  %346 = vmatpush.msra.mxu0 0.0
  %347 = vmatpush.msra.mxu0 %v40
  %348 = vmatpush.msra.mxu0 %v38
  %349 = vmatpush.msra.mxu0 %v36
  %350 = vmatpush.msra.mxu0 %v34
  %351 = vmatpush.msra.mxu0 %v32
  %352 = vmatpush.msra.mxu0 %v30
  %353 = vmatpush.msra.mxu0 %v28
  %354 = vmatpush.msra.mxu0 %v26
  %355 = vmatmul.f32.gmra.mxu0 %v337
  %v356 = vpop.f32.mrf.mxu0
  %v357 = vadd.f32 %v61, %v356
  %358 = vdwg.mxu0
  %359 = vmatpush.msra.mxu0 0.0
  %360 = vmatpush.msra.mxu0 0.0
  %361 = vmatpush.msra.mxu0 0.0
  %362 = vmatpush.msra.mxu0 0.0
  %363 = vmatpush.msra.mxu0 0.0
  %364 = vmatpush.msra.mxu0 0.0
  %365 = vmatpush.msra.mxu0 0.0
  %366 = vmatpush.msra.mxu0 0.0
  %367 = vmatpush.msra.mxu0 %v41
  %368 = vmatpush.msra.mxu0 %v39
  %369 = vmatpush.msra.mxu0 %v37
  %370 = vmatpush.msra.mxu0 %v35
  %371 = vmatpush.msra.mxu0 %v33
  %372 = vmatpush.msra.mxu0 %v31
  %373 = vmatpush.msra.mxu0 %v29
  %374 = vmatpush.msra.mxu0 %v27
  %375 = vmatmul.f32.gmra.mxu0 %v337
  %v376 = vpop.f32.mrf.mxu0
  %v377 = vadd.f32 %v62, %v376
  %378 = vdwg.mxu0
  %s379 = scalar_lea.vmem %s0, 28
  %v380 = vld [vmem:[%s379] sm:$0xf]
  %v382 = vsel %vm65, %v380, 0
  %384 = vmatpush.msra.mxu0 0.0
  %385 = vmatpush.msra.mxu0 0.0
  %386 = vmatpush.msra.mxu0 0.0
  %387 = vmatpush.msra.mxu0 0.0
  %388 = vmatpush.msra.mxu0 0.0
  %389 = vmatpush.msra.mxu0 0.0
  %390 = vmatpush.msra.mxu0 0.0
  %391 = vmatpush.msra.mxu0 0.0
  %392 = vmatpush.msra.mxu0 %v40
  %393 = vmatpush.msra.mxu0 %v38
  %394 = vmatpush.msra.mxu0 %v36
  %395 = vmatpush.msra.mxu0 %v34
  %396 = vmatpush.msra.mxu0 %v32
  %397 = vmatpush.msra.mxu0 %v30
  %398 = vmatpush.msra.mxu0 %v28
  %399 = vmatpush.msra.mxu0 %v26
  %400 = vmatmul.f32.gmra.mxu0 %v382
  %v401 = vpop.f32.mrf.mxu0
  %v402 = vadd.f32 %v61, %v401
  %403 = vdwg.mxu0
  %404 = vmatpush.msra.mxu0 0.0
  %405 = vmatpush.msra.mxu0 0.0
  %406 = vmatpush.msra.mxu0 0.0
  %407 = vmatpush.msra.mxu0 0.0
  %408 = vmatpush.msra.mxu0 0.0
  %409 = vmatpush.msra.mxu0 0.0
  %410 = vmatpush.msra.mxu0 0.0
  %411 = vmatpush.msra.mxu0 0.0
  %412 = vmatpush.msra.mxu0 %v41
  %413 = vmatpush.msra.mxu0 %v39
  %414 = vmatpush.msra.mxu0 %v37
  %415 = vmatpush.msra.mxu0 %v35
  %416 = vmatpush.msra.mxu0 %v33
  %417 = vmatpush.msra.mxu0 %v31
  %418 = vmatpush.msra.mxu0 %v29
  %419 = vmatpush.msra.mxu0 %v27
  %420 = vmatmul.f32.gmra.mxu0 %v382
  %v421 = vpop.f32.mrf.mxu0
  %v422 = vadd.f32 %v62, %v421
  %423 = vdwg.mxu0
  %v425 = vsel %vm65, 0.0, 0
  %427 = vmatpush.msra.mxu0 0.0
  %428 = vmatpush.msra.mxu0 0.0
  %429 = vmatpush.msra.mxu0 0.0
  %430 = vmatpush.msra.mxu0 0.0
  %431 = vmatpush.msra.mxu0 0.0
  %432 = vmatpush.msra.mxu0 0.0
  %433 = vmatpush.msra.mxu0 0.0
  %434 = vmatpush.msra.mxu0 0.0
  %435 = vmatpush.msra.mxu0 %v57
  %436 = vmatpush.msra.mxu0 %v55
  %437 = vmatpush.msra.mxu0 %v53
  %438 = vmatpush.msra.mxu0 %v51
  %439 = vmatpush.msra.mxu0 %v49
  %440 = vmatpush.msra.mxu0 %v47
  %441 = vmatpush.msra.mxu0 %v45
  %442 = vmatpush.msra.mxu0 %v43
  %443 = vmatmul.f32.gmra.mxu0 %v425
  %v444 = vpop.f32.mrf.mxu0
  %v445 = vadd.f32 0.0, %v444
  %446 = vdwg.mxu0
  %447 = vmatpush.msra.mxu0 0.0
  %448 = vmatpush.msra.mxu0 0.0
  %449 = vmatpush.msra.mxu0 0.0
  %450 = vmatpush.msra.mxu0 0.0
  %451 = vmatpush.msra.mxu0 0.0
  %452 = vmatpush.msra.mxu0 0.0
  %453 = vmatpush.msra.mxu0 0.0
  %454 = vmatpush.msra.mxu0 0.0
  %455 = vmatpush.msra.mxu0 %v58
  %456 = vmatpush.msra.mxu0 %v56
  %457 = vmatpush.msra.mxu0 %v54
  %458 = vmatpush.msra.mxu0 %v52
  %459 = vmatpush.msra.mxu0 %v50
  %460 = vmatpush.msra.mxu0 %v48
  %461 = vmatpush.msra.mxu0 %v46
  %462 = vmatpush.msra.mxu0 %v44
  %463 = vmatmul.f32.gmra.mxu0 %v425
  %v464 = vpop.f32.mrf.mxu0
  %v465 = vadd.f32 0.0, %v464
  %466 = vdwg.mxu0
  %v467 = vadd.f32 %v87, %v445
  %v468 = vadd.f32 %v107, %v465
  %v469 = vmul.f32 %v467, 0.5
  %v470 = vmul.f32 %v468, 0.5
  %v471 = vtanh.pop %v469
  %v472 = vtanh.pop %v470
  %v473 = vmul.f32 %v471, 0.5
  %v474 = vmul.f32 %v472, 0.5
  %v475 = vadd.f32 %v473, 0.5
  %v476 = vadd.f32 %v474, 0.5
  %v477 = vtanh.pop %v468
  %v478 = vmul.f32 %v475, 0.0
  %v479 = vmul.f32 %v475, %v477
  %481 = vrot.lane.b32.xlu0 %v479, 64
  %v482 = vpop.permute.xlu0 %481
  %v484 = vadd.f32 %v478, %v482
  %v485 = vtanh.pop %v484
  %v486 = vmul.f32 %v476, %v485
  %488 = vrot.lane.b32.xlu0 %v486, 64
  %v489 = vpop.permute.xlu0 %488
  %v490 = vsel %vm65, %v489, 0
  %492 = vmatpush.msra.mxu0 0.0
  %493 = vmatpush.msra.mxu0 0.0
  %494 = vmatpush.msra.mxu0 0.0
  %495 = vmatpush.msra.mxu0 0.0
  %496 = vmatpush.msra.mxu0 0.0
  %497 = vmatpush.msra.mxu0 0.0
  %498 = vmatpush.msra.mxu0 0.0
  %499 = vmatpush.msra.mxu0 0.0
  %500 = vmatpush.msra.mxu0 %v57
  %501 = vmatpush.msra.mxu0 %v55
  %502 = vmatpush.msra.mxu0 %v53
  %503 = vmatpush.msra.mxu0 %v51
  %504 = vmatpush.msra.mxu0 %v49
  %505 = vmatpush.msra.mxu0 %v47
  %506 = vmatpush.msra.mxu0 %v45
  %507 = vmatpush.msra.mxu0 %v43
  %508 = vmatmul.f32.gmra.mxu0 %v490
  %v509 = vpop.f32.mrf.mxu0
  %v510 = vadd.f32 0.0, %v509
  %511 = vdwg.mxu0
  %512 = vmatpush.msra.mxu0 0.0
  %513 = vmatpush.msra.mxu0 0.0
  %514 = vmatpush.msra.mxu0 0.0
  %515 = vmatpush.msra.mxu0 0.0
  %516 = vmatpush.msra.mxu0 0.0
  %517 = vmatpush.msra.mxu0 0.0
  %518 = vmatpush.msra.mxu0 0.0
  %519 = vmatpush.msra.mxu0 0.0
  %520 = vmatpush.msra.mxu0 %v58
  %521 = vmatpush.msra.mxu0 %v56
  %522 = vmatpush.msra.mxu0 %v54
  %523 = vmatpush.msra.mxu0 %v52
  %524 = vmatpush.msra.mxu0 %v50
  %525 = vmatpush.msra.mxu0 %v48
  %526 = vmatpush.msra.mxu0 %v46
  %527 = vmatpush.msra.mxu0 %v44
  %528 = vmatmul.f32.gmra.mxu0 %v490
  %v529 = vpop.f32.mrf.mxu0
  %v530 = vadd.f32 0.0, %v529
  %531 = vdwg.mxu0
  %v532 = vadd.f32 %v132, %v510
  %v533 = vadd.f32 %v152, %v530
  %v534 = vmul.f32 %v532, 0.5
  %v535 = vmul.f32 %v533, 0.5
  %v536 = vtanh.pop %v534
  %v537 = vtanh.pop %v535
  %v538 = vmul.f32 %v536, 0.5
  %v539 = vmul.f32 %v537, 0.5
  %v540 = vadd.f32 %v538, 0.5
  %v541 = vadd.f32 %v539, 0.5
  %v542 = vtanh.pop %v533
  %v543 = vmul.f32 %v540, %v484
  %v544 = vmul.f32 %v540, %v542
  %546 = vrot.lane.b32.xlu0 %v544, 64
  %v547 = vpop.permute.xlu0 %546
  %v549 = vadd.f32 %v543, %v547
  %v550 = vtanh.pop %v549
  %v551 = vmul.f32 %v541, %v550
  %553 = vrot.lane.b32.xlu0 %v551, 64
  %v554 = vpop.permute.xlu0 %553
  %v555 = vsel %vm65, %v554, 0
  %557 = vmatpush.msra.mxu0 0.0
  %558 = vmatpush.msra.mxu0 0.0
  %559 = vmatpush.msra.mxu0 0.0
  %560 = vmatpush.msra.mxu0 0.0
  %561 = vmatpush.msra.mxu0 0.0
  %562 = vmatpush.msra.mxu0 0.0
  %563 = vmatpush.msra.mxu0 0.0
  %564 = vmatpush.msra.mxu0 0.0
  %565 = vmatpush.msra.mxu0 %v57
  %566 = vmatpush.msra.mxu0 %v55
  %567 = vmatpush.msra.mxu0 %v53
  %568 = vmatpush.msra.mxu0 %v51
  %569 = vmatpush.msra.mxu0 %v49
  %570 = vmatpush.msra.mxu0 %v47
  %571 = vmatpush.msra.mxu0 %v45
  %572 = vmatpush.msra.mxu0 %v43
  %573 = vmatmul.f32.gmra.mxu0 %v555
  %v574 = vpop.f32.mrf.mxu0
  %v575 = vadd.f32 0.0, %v574
  %576 = vdwg.mxu0
  %577 = vmatpush.msra.mxu0 0.0
  %578 = vmatpush.msra.mxu0 0.0
  %579 = vmatpush.msra.mxu0 0.0
  %580 = vmatpush.msra.mxu0 0.0
  %581 = vmatpush.msra.mxu0 0.0
  %582 = vmatpush.msra.mxu0 0.0
  %583 = vmatpush.msra.mxu0 0.0
  %584 = vmatpush.msra.mxu0 0.0
  %585 = vmatpush.msra.mxu0 %v58
  %586 = vmatpush.msra.mxu0 %v56
  %587 = vmatpush.msra.mxu0 %v54
  %588 = vmatpush.msra.mxu0 %v52
  %589 = vmatpush.msra.mxu0 %v50
  %590 = vmatpush.msra.mxu0 %v48
  %591 = vmatpush.msra.mxu0 %v46
  %592 = vmatpush.msra.mxu0 %v44
  %593 = vmatmul.f32.gmra.mxu0 %v555
  %v594 = vpop.f32.mrf.mxu0
  %v595 = vadd.f32 0.0, %v594
  %596 = vdwg.mxu0
  %v597 = vadd.f32 %v177, %v575
  %v598 = vadd.f32 %v197, %v595
  %v599 = vmul.f32 %v597, 0.5
  %v600 = vmul.f32 %v598, 0.5
  %v601 = vtanh.pop %v599
  %v602 = vtanh.pop %v600
  %v603 = vmul.f32 %v601, 0.5
  %v604 = vmul.f32 %v602, 0.5
  %v605 = vadd.f32 %v603, 0.5
  %v606 = vadd.f32 %v604, 0.5
  %v607 = vtanh.pop %v598
  %v608 = vmul.f32 %v605, %v549
  %v609 = vmul.f32 %v605, %v607
  %611 = vrot.lane.b32.xlu0 %v609, 64
  %v612 = vpop.permute.xlu0 %611
  %v614 = vadd.f32 %v608, %v612
  %v615 = vtanh.pop %v614
  %v616 = vmul.f32 %v606, %v615
  %618 = vrot.lane.b32.xlu0 %v616, 64
  %v619 = vpop.permute.xlu0 %618
  %v620 = vsel %vm65, %v619, 0
  %622 = vmatpush.msra.mxu0 0.0
  %623 = vmatpush.msra.mxu0 0.0
  %624 = vmatpush.msra.mxu0 0.0
  %625 = vmatpush.msra.mxu0 0.0
  %626 = vmatpush.msra.mxu0 0.0
  %627 = vmatpush.msra.mxu0 0.0
  %628 = vmatpush.msra.mxu0 0.0
  %629 = vmatpush.msra.mxu0 0.0
  %630 = vmatpush.msra.mxu0 %v57
  %631 = vmatpush.msra.mxu0 %v55
  %632 = vmatpush.msra.mxu0 %v53
  %633 = vmatpush.msra.mxu0 %v51
  %634 = vmatpush.msra.mxu0 %v49
  %635 = vmatpush.msra.mxu0 %v47
  %636 = vmatpush.msra.mxu0 %v45
  %637 = vmatpush.msra.mxu0 %v43
  %638 = vmatmul.f32.gmra.mxu0 %v620
  %v639 = vpop.f32.mrf.mxu0
  %v640 = vadd.f32 0.0, %v639
  %641 = vdwg.mxu0
  %642 = vmatpush.msra.mxu0 0.0
  %643 = vmatpush.msra.mxu0 0.0
  %644 = vmatpush.msra.mxu0 0.0
  %645 = vmatpush.msra.mxu0 0.0
  %646 = vmatpush.msra.mxu0 0.0
  %647 = vmatpush.msra.mxu0 0.0
  %648 = vmatpush.msra.mxu0 0.0
  %649 = vmatpush.msra.mxu0 0.0
  %650 = vmatpush.msra.mxu0 %v58
  %651 = vmatpush.msra.mxu0 %v56
  %652 = vmatpush.msra.mxu0 %v54
  %653 = vmatpush.msra.mxu0 %v52
  %654 = vmatpush.msra.mxu0 %v50
  %655 = vmatpush.msra.mxu0 %v48
  %656 = vmatpush.msra.mxu0 %v46
  %657 = vmatpush.msra.mxu0 %v44
  %658 = vmatmul.f32.gmra.mxu0 %v620
  %v659 = vpop.f32.mrf.mxu0
  %v660 = vadd.f32 0.0, %v659
  %661 = vdwg.mxu0
  %v662 = vadd.f32 %v222, %v640
  %v663 = vadd.f32 %v242, %v660
  %v664 = vmul.f32 %v662, 0.5
  %v665 = vmul.f32 %v663, 0.5
  %v666 = vtanh.pop %v664
  %v667 = vtanh.pop %v665
  %v668 = vmul.f32 %v666, 0.5
  %v669 = vmul.f32 %v667, 0.5
  %v670 = vadd.f32 %v668, 0.5
  %v671 = vadd.f32 %v669, 0.5
  %v672 = vtanh.pop %v663
  %v673 = vmul.f32 %v670, %v614
  %v674 = vmul.f32 %v670, %v672
  %676 = vrot.lane.b32.xlu0 %v674, 64
  %v677 = vpop.permute.xlu0 %676
  %v679 = vadd.f32 %v673, %v677
  %v680 = vtanh.pop %v679
  %v681 = vmul.f32 %v671, %v680
  %683 = vrot.lane.b32.xlu0 %v681, 64
  %v684 = vpop.permute.xlu0 %683
  %v685 = vsel %vm65, %v684, 0
  %687 = vmatpush.msra.mxu0 0.0
  %688 = vmatpush.msra.mxu0 0.0
  %689 = vmatpush.msra.mxu0 0.0
  %690 = vmatpush.msra.mxu0 0.0
  %691 = vmatpush.msra.mxu0 0.0
  %692 = vmatpush.msra.mxu0 0.0
  %693 = vmatpush.msra.mxu0 0.0
  %694 = vmatpush.msra.mxu0 0.0
  %695 = vmatpush.msra.mxu0 %v57
  %696 = vmatpush.msra.mxu0 %v55
  %697 = vmatpush.msra.mxu0 %v53
  %698 = vmatpush.msra.mxu0 %v51
  %699 = vmatpush.msra.mxu0 %v49
  %700 = vmatpush.msra.mxu0 %v47
  %701 = vmatpush.msra.mxu0 %v45
  %702 = vmatpush.msra.mxu0 %v43
  %703 = vmatmul.f32.gmra.mxu0 %v685
  %v704 = vpop.f32.mrf.mxu0
  %v705 = vadd.f32 0.0, %v704
  %706 = vdwg.mxu0
  %707 = vmatpush.msra.mxu0 0.0
  %708 = vmatpush.msra.mxu0 0.0
  %709 = vmatpush.msra.mxu0 0.0
  %710 = vmatpush.msra.mxu0 0.0
  %711 = vmatpush.msra.mxu0 0.0
  %712 = vmatpush.msra.mxu0 0.0
  %713 = vmatpush.msra.mxu0 0.0
  %714 = vmatpush.msra.mxu0 0.0
  %715 = vmatpush.msra.mxu0 %v58
  %716 = vmatpush.msra.mxu0 %v56
  %717 = vmatpush.msra.mxu0 %v54
  %718 = vmatpush.msra.mxu0 %v52
  %719 = vmatpush.msra.mxu0 %v50
  %720 = vmatpush.msra.mxu0 %v48
  %721 = vmatpush.msra.mxu0 %v46
  %722 = vmatpush.msra.mxu0 %v44
  %723 = vmatmul.f32.gmra.mxu0 %v685
  %v724 = vpop.f32.mrf.mxu0
  %v725 = vadd.f32 0.0, %v724
  %726 = vdwg.mxu0
  %v727 = vadd.f32 %v267, %v705
  %v728 = vadd.f32 %v287, %v725
  %v729 = vmul.f32 %v727, 0.5
  %v730 = vmul.f32 %v728, 0.5
  %v731 = vtanh.pop %v729
  %v732 = vtanh.pop %v730
  %v733 = vmul.f32 %v731, 0.5
  %v734 = vmul.f32 %v732, 0.5
  %v735 = vadd.f32 %v733, 0.5
  %v736 = vadd.f32 %v734, 0.5
  %v737 = vtanh.pop %v728
  %v738 = vmul.f32 %v735, %v679
  %v739 = vmul.f32 %v735, %v737
  %741 = vrot.lane.b32.xlu0 %v739, 64
  %v742 = vpop.permute.xlu0 %741
  %v744 = vadd.f32 %v738, %v742
  %v745 = vtanh.pop %v744
  %v746 = vmul.f32 %v736, %v745
  %748 = vrot.lane.b32.xlu0 %v746, 64
  %v749 = vpop.permute.xlu0 %748
  %v750 = vsel %vm65, %v749, 0
  %752 = vmatpush.msra.mxu0 0.0
  %753 = vmatpush.msra.mxu0 0.0
  %754 = vmatpush.msra.mxu0 0.0
  %755 = vmatpush.msra.mxu0 0.0
  %756 = vmatpush.msra.mxu0 0.0
  %757 = vmatpush.msra.mxu0 0.0
  %758 = vmatpush.msra.mxu0 0.0
  %759 = vmatpush.msra.mxu0 0.0
  %760 = vmatpush.msra.mxu0 %v57
  %761 = vmatpush.msra.mxu0 %v55
  %762 = vmatpush.msra.mxu0 %v53
  %763 = vmatpush.msra.mxu0 %v51
  %764 = vmatpush.msra.mxu0 %v49
  %765 = vmatpush.msra.mxu0 %v47
  %766 = vmatpush.msra.mxu0 %v45
  %767 = vmatpush.msra.mxu0 %v43
  %768 = vmatmul.f32.gmra.mxu0 %v750
  %v769 = vpop.f32.mrf.mxu0
  %v770 = vadd.f32 0.0, %v769
  %771 = vdwg.mxu0
  %772 = vmatpush.msra.mxu0 0.0
  %773 = vmatpush.msra.mxu0 0.0
  %774 = vmatpush.msra.mxu0 0.0
  %775 = vmatpush.msra.mxu0 0.0
  %776 = vmatpush.msra.mxu0 0.0
  %777 = vmatpush.msra.mxu0 0.0
  %778 = vmatpush.msra.mxu0 0.0
  %779 = vmatpush.msra.mxu0 0.0
  %780 = vmatpush.msra.mxu0 %v58
  %781 = vmatpush.msra.mxu0 %v56
  %782 = vmatpush.msra.mxu0 %v54
  %783 = vmatpush.msra.mxu0 %v52
  %784 = vmatpush.msra.mxu0 %v50
  %785 = vmatpush.msra.mxu0 %v48
  %786 = vmatpush.msra.mxu0 %v46
  %787 = vmatpush.msra.mxu0 %v44
  %788 = vmatmul.f32.gmra.mxu0 %v750
  %v789 = vpop.f32.mrf.mxu0
  %v790 = vadd.f32 0.0, %v789
  %791 = vdwg.mxu0
  %v792 = vadd.f32 %v312, %v770
  %v793 = vadd.f32 %v332, %v790
  %v794 = vmul.f32 %v792, 0.5
  %v795 = vmul.f32 %v793, 0.5
  %v796 = vtanh.pop %v794
  %v797 = vtanh.pop %v795
  %v798 = vmul.f32 %v796, 0.5
  %v799 = vmul.f32 %v797, 0.5
  %v800 = vadd.f32 %v798, 0.5
  %v801 = vadd.f32 %v799, 0.5
  %v802 = vtanh.pop %v793
  %v803 = vmul.f32 %v800, %v744
  %v804 = vmul.f32 %v800, %v802
  %806 = vrot.lane.b32.xlu0 %v804, 64
  %v807 = vpop.permute.xlu0 %806
  %v809 = vadd.f32 %v803, %v807
  %v810 = vtanh.pop %v809
  %v811 = vmul.f32 %v801, %v810
  %813 = vrot.lane.b32.xlu0 %v811, 64
  %v814 = vpop.permute.xlu0 %813
  %v815 = vsel %vm65, %v814, 0
  %817 = vmatpush.msra.mxu0 0.0
  %818 = vmatpush.msra.mxu0 0.0
  %819 = vmatpush.msra.mxu0 0.0
  %820 = vmatpush.msra.mxu0 0.0
  %821 = vmatpush.msra.mxu0 0.0
  %822 = vmatpush.msra.mxu0 0.0
  %823 = vmatpush.msra.mxu0 0.0
  %824 = vmatpush.msra.mxu0 0.0
  %825 = vmatpush.msra.mxu0 %v57
  %826 = vmatpush.msra.mxu0 %v55
  %827 = vmatpush.msra.mxu0 %v53
  %828 = vmatpush.msra.mxu0 %v51
  %829 = vmatpush.msra.mxu0 %v49
  %830 = vmatpush.msra.mxu0 %v47
  %831 = vmatpush.msra.mxu0 %v45
  %832 = vmatpush.msra.mxu0 %v43
  %833 = vmatmul.f32.gmra.mxu0 %v815
  %v834 = vpop.f32.mrf.mxu0
  %v835 = vadd.f32 0.0, %v834
  %836 = vdwg.mxu0
  %837 = vmatpush.msra.mxu0 0.0
  %838 = vmatpush.msra.mxu0 0.0
  %839 = vmatpush.msra.mxu0 0.0
  %840 = vmatpush.msra.mxu0 0.0
  %841 = vmatpush.msra.mxu0 0.0
  %842 = vmatpush.msra.mxu0 0.0
  %843 = vmatpush.msra.mxu0 0.0
  %844 = vmatpush.msra.mxu0 0.0
  %845 = vmatpush.msra.mxu0 %v58
  %846 = vmatpush.msra.mxu0 %v56
  %847 = vmatpush.msra.mxu0 %v54
  %848 = vmatpush.msra.mxu0 %v52
  %849 = vmatpush.msra.mxu0 %v50
  %850 = vmatpush.msra.mxu0 %v48
  %851 = vmatpush.msra.mxu0 %v46
  %852 = vmatpush.msra.mxu0 %v44
  %853 = vmatmul.f32.gmra.mxu0 %v815
  %v854 = vpop.f32.mrf.mxu0
  %v855 = vadd.f32 0.0, %v854
  %856 = vdwg.mxu0
  %v857 = vadd.f32 %v357, %v835
  %v858 = vadd.f32 %v377, %v855
  %v859 = vmul.f32 %v857, 0.5
  %v860 = vmul.f32 %v858, 0.5
  %v861 = vtanh.pop %v859
  %v862 = vtanh.pop %v860
  %v863 = vmul.f32 %v861, 0.5
  %v864 = vmul.f32 %v862, 0.5
  %v865 = vadd.f32 %v863, 0.5
  %v866 = vadd.f32 %v864, 0.5
  %v867 = vtanh.pop %v858
  %v868 = vmul.f32 %v865, %v809
  %v869 = vmul.f32 %v865, %v867
  %871 = vrot.lane.b32.xlu0 %v869, 64
  %v872 = vpop.permute.xlu0 %871
  %v874 = vadd.f32 %v868, %v872
  %v875 = vtanh.pop %v874
  %v876 = vmul.f32 %v866, %v875
  %878 = vrot.lane.b32.xlu0 %v876, 64
  %v879 = vpop.permute.xlu0 %878
  %v880 = vsel %vm65, %v879, 0
  %882 = vmatpush.msra.mxu0 0.0
  %883 = vmatpush.msra.mxu0 0.0
  %884 = vmatpush.msra.mxu0 0.0
  %885 = vmatpush.msra.mxu0 0.0
  %886 = vmatpush.msra.mxu0 0.0
  %887 = vmatpush.msra.mxu0 0.0
  %888 = vmatpush.msra.mxu0 0.0
  %889 = vmatpush.msra.mxu0 0.0
  %890 = vmatpush.msra.mxu0 %v57
  %891 = vmatpush.msra.mxu0 %v55
  %892 = vmatpush.msra.mxu0 %v53
  %893 = vmatpush.msra.mxu0 %v51
  %894 = vmatpush.msra.mxu0 %v49
  %895 = vmatpush.msra.mxu0 %v47
  %896 = vmatpush.msra.mxu0 %v45
  %897 = vmatpush.msra.mxu0 %v43
  %898 = vmatmul.f32.gmra.mxu0 %v880
  %v899 = vpop.f32.mrf.mxu0
  %v900 = vadd.f32 0.0, %v899
  %901 = vdwg.mxu0
  %902 = vmatpush.msra.mxu0 0.0
  %903 = vmatpush.msra.mxu0 0.0
  %904 = vmatpush.msra.mxu0 0.0
  %905 = vmatpush.msra.mxu0 0.0
  %906 = vmatpush.msra.mxu0 0.0
  %907 = vmatpush.msra.mxu0 0.0
  %908 = vmatpush.msra.mxu0 0.0
  %909 = vmatpush.msra.mxu0 0.0
  %910 = vmatpush.msra.mxu0 %v58
  %911 = vmatpush.msra.mxu0 %v56
  %912 = vmatpush.msra.mxu0 %v54
  %913 = vmatpush.msra.mxu0 %v52
  %914 = vmatpush.msra.mxu0 %v50
  %915 = vmatpush.msra.mxu0 %v48
  %916 = vmatpush.msra.mxu0 %v46
  %917 = vmatpush.msra.mxu0 %v44
  %918 = vmatmul.f32.gmra.mxu0 %v880
  %v919 = vpop.f32.mrf.mxu0
  %v920 = vadd.f32 0.0, %v919
  %921 = vdwg.mxu0
  %v922 = vadd.f32 %v402, %v900
  %v923 = vadd.f32 %v422, %v920
  %v924 = vmul.f32 %v922, 0.5
  %v925 = vmul.f32 %v923, 0.5
  %v926 = vtanh.pop %v924
  %v927 = vtanh.pop %v925
  %v928 = vmul.f32 %v926, 0.5
  %v929 = vmul.f32 %v927, 0.5
  %v930 = vadd.f32 %v928, 0.5
  %v931 = vadd.f32 %v929, 0.5
  %v932 = vtanh.pop %v923
  %v933 = vmul.f32 %v930, %v874
  %v934 = vmul.f32 %v930, %v932
  %936 = vrot.lane.b32.xlu0 %v934, 64
  %v937 = vpop.permute.xlu0 %936
  %v939 = vadd.f32 %v933, %v937
  %v940 = vtanh.pop %v939
  %v941 = vmul.f32 %v931, %v940
  %v942 = vld [vmem:[%s4] sm:$0xff]
  %v943 = vld [vmem:[%s4 + $0x8] sm:$0xff]
  %v944 = vld [vmem:[%s4 + $0x10] sm:$0xff]
  %v945 = vld [vmem:[%s4 + $0x18] sm:$0xff]
  %v946 = vld [vmem:[%s5] sm:$0xff]
  %v947 = vld [vmem:[%s5 + $0x8] sm:$0xff]
  %v948 = vld [vmem:[%s5 + $0x10] sm:$0xff]
  %v949 = vld [vmem:[%s5 + $0x18] sm:$0xff]
  %v950 = vld [vmem:[%s6] sm:$0x1]
  %952 = vrot.lane.b32.xlu0 %v941, 32
  %v953 = vpop.permute.xlu0 %952
  %vm954 = vcmask 261120
  %v955 = vsel %vm954, %v953, 0
  %957 = vmatpush.msra.mxu0 0.0
  %958 = vmatpush.msra.mxu0 0.0
  %959 = vmatpush.msra.mxu0 0.0
  %960 = vmatpush.msra.mxu0 0.0
  %961 = vmatpush.msra.mxu0 0.0
  %962 = vmatpush.msra.mxu0 0.0
  %963 = vmatpush.msra.mxu0 0.0
  %964 = vmatpush.msra.mxu0 0.0
  %965 = vmatpush.msra.mxu0 0.0
  %966 = vmatpush.msra.mxu0 0.0
  %967 = vmatpush.msra.mxu0 0.0
  %968 = vmatpush.msra.mxu0 0.0
  %969 = vmatpush.msra.mxu0 %v949
  %970 = vmatpush.msra.mxu0 %v948
  %971 = vmatpush.msra.mxu0 %v947
  %972 = vmatpush.msra.mxu0 %v946
  %973 = vmatmul.f32.gmra.mxu0 %v955
  %v974 = vpop.f32.mrf.mxu0
  %v975 = vadd.f32 0.0, %v974
  %976 = vdwg.mxu0
  %v977 = vsel %vm954, %v489, 0
  %979 = vmatpush.msra.mxu0 0.0
  %980 = vmatpush.msra.mxu0 0.0
  %981 = vmatpush.msra.mxu0 0.0
  %982 = vmatpush.msra.mxu0 0.0
  %983 = vmatpush.msra.mxu0 0.0
  %984 = vmatpush.msra.mxu0 0.0
  %985 = vmatpush.msra.mxu0 0.0
  %986 = vmatpush.msra.mxu0 0.0
  %987 = vmatpush.msra.mxu0 0.0
  %988 = vmatpush.msra.mxu0 0.0
  %989 = vmatpush.msra.mxu0 0.0
  %990 = vmatpush.msra.mxu0 0.0
  %991 = vmatpush.msra.mxu0 %v945
  %992 = vmatpush.msra.mxu0 %v944
  %993 = vmatpush.msra.mxu0 %v943
  %994 = vmatpush.msra.mxu0 %v942
  %995 = vmatmul.f32.gmra.mxu0 %v977
  %v996 = vpop.f32.mrf.mxu0
  %v997 = vadd.f32 %v975, %v996
  %998 = vdwg.mxu0
  %v1000 = vperm.slane %v950, 0
  %v1002 = vadd.f32 %v997, %v1000
  %1003 = vst [vmem:[%s7] sm:$0xf] %v1002
  %1004 = vrot.lane.b32.xlu0 %v876, 32
  %v1005 = vpop.permute.xlu0 %1004
  %v1006 = vsel %vm954, %v1005, 0
  %1008 = vmatpush.msra.mxu0 0.0
  %1009 = vmatpush.msra.mxu0 0.0
  %1010 = vmatpush.msra.mxu0 0.0
  %1011 = vmatpush.msra.mxu0 0.0
  %1012 = vmatpush.msra.mxu0 0.0
  %1013 = vmatpush.msra.mxu0 0.0
  %1014 = vmatpush.msra.mxu0 0.0
  %1015 = vmatpush.msra.mxu0 0.0
  %1016 = vmatpush.msra.mxu0 0.0
  %1017 = vmatpush.msra.mxu0 0.0
  %1018 = vmatpush.msra.mxu0 0.0
  %1019 = vmatpush.msra.mxu0 0.0
  %1020 = vmatpush.msra.mxu0 %v949
  %1021 = vmatpush.msra.mxu0 %v948
  %1022 = vmatpush.msra.mxu0 %v947
  %1023 = vmatpush.msra.mxu0 %v946
  %1024 = vmatmul.f32.gmra.mxu0 %v1006
  %v1025 = vpop.f32.mrf.mxu0
  %v1026 = vadd.f32 0.0, %v1025
  %1027 = vdwg.mxu0
  %v1028 = vsel %vm954, %v554, 0
  %1030 = vmatpush.msra.mxu0 0.0
  %1031 = vmatpush.msra.mxu0 0.0
  %1032 = vmatpush.msra.mxu0 0.0
  %1033 = vmatpush.msra.mxu0 0.0
  %1034 = vmatpush.msra.mxu0 0.0
  %1035 = vmatpush.msra.mxu0 0.0
  %1036 = vmatpush.msra.mxu0 0.0
  %1037 = vmatpush.msra.mxu0 0.0
  %1038 = vmatpush.msra.mxu0 0.0
  %1039 = vmatpush.msra.mxu0 0.0
  %1040 = vmatpush.msra.mxu0 0.0
  %1041 = vmatpush.msra.mxu0 0.0
  %1042 = vmatpush.msra.mxu0 %v945
  %1043 = vmatpush.msra.mxu0 %v944
  %1044 = vmatpush.msra.mxu0 %v943
  %1045 = vmatpush.msra.mxu0 %v942
  %1046 = vmatmul.f32.gmra.mxu0 %v1028
  %v1047 = vpop.f32.mrf.mxu0
  %v1048 = vadd.f32 %v1026, %v1047
  %1049 = vdwg.mxu0
  %v1050 = vadd.f32 %v1048, %v1000
  %s1051 = scalar_lea.vmem %s7, 4
  %1052 = vst [vmem:[%s1051] sm:$0xf] %v1050
  %1053 = vrot.lane.b32.xlu0 %v811, 32
  %v1054 = vpop.permute.xlu0 %1053
  %v1055 = vsel %vm954, %v1054, 0
  %1057 = vmatpush.msra.mxu0 0.0
  %1058 = vmatpush.msra.mxu0 0.0
  %1059 = vmatpush.msra.mxu0 0.0
  %1060 = vmatpush.msra.mxu0 0.0
  %1061 = vmatpush.msra.mxu0 0.0
  %1062 = vmatpush.msra.mxu0 0.0
  %1063 = vmatpush.msra.mxu0 0.0
  %1064 = vmatpush.msra.mxu0 0.0
  %1065 = vmatpush.msra.mxu0 0.0
  %1066 = vmatpush.msra.mxu0 0.0
  %1067 = vmatpush.msra.mxu0 0.0
  %1068 = vmatpush.msra.mxu0 0.0
  %1069 = vmatpush.msra.mxu0 %v949
  %1070 = vmatpush.msra.mxu0 %v948
  %1071 = vmatpush.msra.mxu0 %v947
  %1072 = vmatpush.msra.mxu0 %v946
  %1073 = vmatmul.f32.gmra.mxu0 %v1055
  %v1074 = vpop.f32.mrf.mxu0
  %v1075 = vadd.f32 0.0, %v1074
  %1076 = vdwg.mxu0
  %v1077 = vsel %vm954, %v619, 0
  %1079 = vmatpush.msra.mxu0 0.0
  %1080 = vmatpush.msra.mxu0 0.0
  %1081 = vmatpush.msra.mxu0 0.0
  %1082 = vmatpush.msra.mxu0 0.0
  %1083 = vmatpush.msra.mxu0 0.0
  %1084 = vmatpush.msra.mxu0 0.0
  %1085 = vmatpush.msra.mxu0 0.0
  %1086 = vmatpush.msra.mxu0 0.0
  %1087 = vmatpush.msra.mxu0 0.0
  %1088 = vmatpush.msra.mxu0 0.0
  %1089 = vmatpush.msra.mxu0 0.0
  %1090 = vmatpush.msra.mxu0 0.0
  %1091 = vmatpush.msra.mxu0 %v945
  %1092 = vmatpush.msra.mxu0 %v944
  %1093 = vmatpush.msra.mxu0 %v943
  %1094 = vmatpush.msra.mxu0 %v942
  %1095 = vmatmul.f32.gmra.mxu0 %v1077
  %v1096 = vpop.f32.mrf.mxu0
  %v1097 = vadd.f32 %v1075, %v1096
  %1098 = vdwg.mxu0
  %v1099 = vadd.f32 %v1097, %v1000
  %s1100 = scalar_lea.vmem %s7, 8
  %1101 = vst [vmem:[%s1100] sm:$0xf] %v1099
  %1102 = vrot.lane.b32.xlu0 %v746, 32
  %v1103 = vpop.permute.xlu0 %1102
  %v1104 = vsel %vm954, %v1103, 0
  %1106 = vmatpush.msra.mxu0 0.0
  %1107 = vmatpush.msra.mxu0 0.0
  %1108 = vmatpush.msra.mxu0 0.0
  %1109 = vmatpush.msra.mxu0 0.0
  %1110 = vmatpush.msra.mxu0 0.0
  %1111 = vmatpush.msra.mxu0 0.0
  %1112 = vmatpush.msra.mxu0 0.0
  %1113 = vmatpush.msra.mxu0 0.0
  %1114 = vmatpush.msra.mxu0 0.0
  %1115 = vmatpush.msra.mxu0 0.0
  %1116 = vmatpush.msra.mxu0 0.0
  %1117 = vmatpush.msra.mxu0 0.0
  %1118 = vmatpush.msra.mxu0 %v949
  %1119 = vmatpush.msra.mxu0 %v948
  %1120 = vmatpush.msra.mxu0 %v947
  %1121 = vmatpush.msra.mxu0 %v946
  %1122 = vmatmul.f32.gmra.mxu0 %v1104
  %v1123 = vpop.f32.mrf.mxu0
  %v1124 = vadd.f32 0.0, %v1123
  %1125 = vdwg.mxu0
  %v1126 = vsel %vm954, %v684, 0
  %1128 = vmatpush.msra.mxu0 0.0
  %1129 = vmatpush.msra.mxu0 0.0
  %1130 = vmatpush.msra.mxu0 0.0
  %1131 = vmatpush.msra.mxu0 0.0
  %1132 = vmatpush.msra.mxu0 0.0
  %1133 = vmatpush.msra.mxu0 0.0
  %1134 = vmatpush.msra.mxu0 0.0
  %1135 = vmatpush.msra.mxu0 0.0
  %1136 = vmatpush.msra.mxu0 0.0
  %1137 = vmatpush.msra.mxu0 0.0
  %1138 = vmatpush.msra.mxu0 0.0
  %1139 = vmatpush.msra.mxu0 0.0
  %1140 = vmatpush.msra.mxu0 %v945
  %1141 = vmatpush.msra.mxu0 %v944
  %1142 = vmatpush.msra.mxu0 %v943
  %1143 = vmatpush.msra.mxu0 %v942
  %1144 = vmatmul.f32.gmra.mxu0 %v1126
  %v1145 = vpop.f32.mrf.mxu0
  %v1146 = vadd.f32 %v1124, %v1145
  %1147 = vdwg.mxu0
  %v1148 = vadd.f32 %v1146, %v1000
  %s1149 = scalar_lea.vmem %s7, 12
  %1150 = vst [vmem:[%s1149] sm:$0xf] %v1148
  %1151 = vrot.lane.b32.xlu0 %v681, 32
  %v1152 = vpop.permute.xlu0 %1151
  %v1153 = vsel %vm954, %v1152, 0
  %1155 = vmatpush.msra.mxu0 0.0
  %1156 = vmatpush.msra.mxu0 0.0
  %1157 = vmatpush.msra.mxu0 0.0
  %1158 = vmatpush.msra.mxu0 0.0
  %1159 = vmatpush.msra.mxu0 0.0
  %1160 = vmatpush.msra.mxu0 0.0
  %1161 = vmatpush.msra.mxu0 0.0
  %1162 = vmatpush.msra.mxu0 0.0
  %1163 = vmatpush.msra.mxu0 0.0
  %1164 = vmatpush.msra.mxu0 0.0
  %1165 = vmatpush.msra.mxu0 0.0
  %1166 = vmatpush.msra.mxu0 0.0
  %1167 = vmatpush.msra.mxu0 %v949
  %1168 = vmatpush.msra.mxu0 %v948
  %1169 = vmatpush.msra.mxu0 %v947
  %1170 = vmatpush.msra.mxu0 %v946
  %1171 = vmatmul.f32.gmra.mxu0 %v1153
  %v1172 = vpop.f32.mrf.mxu0
  %v1173 = vadd.f32 0.0, %v1172
  %1174 = vdwg.mxu0
  %v1175 = vsel %vm954, %v749, 0
  %1177 = vmatpush.msra.mxu0 0.0
  %1178 = vmatpush.msra.mxu0 0.0
  %1179 = vmatpush.msra.mxu0 0.0
  %1180 = vmatpush.msra.mxu0 0.0
  %1181 = vmatpush.msra.mxu0 0.0
  %1182 = vmatpush.msra.mxu0 0.0
  %1183 = vmatpush.msra.mxu0 0.0
  %1184 = vmatpush.msra.mxu0 0.0
  %1185 = vmatpush.msra.mxu0 0.0
  %1186 = vmatpush.msra.mxu0 0.0
  %1187 = vmatpush.msra.mxu0 0.0
  %1188 = vmatpush.msra.mxu0 0.0
  %1189 = vmatpush.msra.mxu0 %v945
  %1190 = vmatpush.msra.mxu0 %v944
  %1191 = vmatpush.msra.mxu0 %v943
  %1192 = vmatpush.msra.mxu0 %v942
  %1193 = vmatmul.f32.gmra.mxu0 %v1175
  %v1194 = vpop.f32.mrf.mxu0
  %v1195 = vadd.f32 %v1173, %v1194
  %1196 = vdwg.mxu0
  %v1197 = vadd.f32 %v1195, %v1000
  %s1198 = scalar_lea.vmem %s7, 16
  %1199 = vst [vmem:[%s1198] sm:$0xf] %v1197
  %1200 = vrot.lane.b32.xlu0 %v616, 32
  %v1201 = vpop.permute.xlu0 %1200
  %v1202 = vsel %vm954, %v1201, 0
  %1204 = vmatpush.msra.mxu0 0.0
  %1205 = vmatpush.msra.mxu0 0.0
  %1206 = vmatpush.msra.mxu0 0.0
  %1207 = vmatpush.msra.mxu0 0.0
  %1208 = vmatpush.msra.mxu0 0.0
  %1209 = vmatpush.msra.mxu0 0.0
  %1210 = vmatpush.msra.mxu0 0.0
  %1211 = vmatpush.msra.mxu0 0.0
  %1212 = vmatpush.msra.mxu0 0.0
  %1213 = vmatpush.msra.mxu0 0.0
  %1214 = vmatpush.msra.mxu0 0.0
  %1215 = vmatpush.msra.mxu0 0.0
  %1216 = vmatpush.msra.mxu0 %v949
  %1217 = vmatpush.msra.mxu0 %v948
  %1218 = vmatpush.msra.mxu0 %v947
  %1219 = vmatpush.msra.mxu0 %v946
  %1220 = vmatmul.f32.gmra.mxu0 %v1202
  %v1221 = vpop.f32.mrf.mxu0
  %v1222 = vadd.f32 0.0, %v1221
  %1223 = vdwg.mxu0
  %v1224 = vsel %vm954, %v814, 0
  %1226 = vmatpush.msra.mxu0 0.0
  %1227 = vmatpush.msra.mxu0 0.0
  %1228 = vmatpush.msra.mxu0 0.0
  %1229 = vmatpush.msra.mxu0 0.0
  %1230 = vmatpush.msra.mxu0 0.0
  %1231 = vmatpush.msra.mxu0 0.0
  %1232 = vmatpush.msra.mxu0 0.0
  %1233 = vmatpush.msra.mxu0 0.0
  %1234 = vmatpush.msra.mxu0 0.0
  %1235 = vmatpush.msra.mxu0 0.0
  %1236 = vmatpush.msra.mxu0 0.0
  %1237 = vmatpush.msra.mxu0 0.0
  %1238 = vmatpush.msra.mxu0 %v945
  %1239 = vmatpush.msra.mxu0 %v944
  %1240 = vmatpush.msra.mxu0 %v943
  %1241 = vmatpush.msra.mxu0 %v942
  %1242 = vmatmul.f32.gmra.mxu0 %v1224
  %v1243 = vpop.f32.mrf.mxu0
  %v1244 = vadd.f32 %v1222, %v1243
  %1245 = vdwg.mxu0
  %v1246 = vadd.f32 %v1244, %v1000
  %s1247 = scalar_lea.vmem %s7, 20
  %1248 = vst [vmem:[%s1247] sm:$0xf] %v1246
  %1249 = vrot.lane.b32.xlu0 %v551, 32
  %v1250 = vpop.permute.xlu0 %1249
  %v1251 = vsel %vm954, %v1250, 0
  %1253 = vmatpush.msra.mxu0 0.0
  %1254 = vmatpush.msra.mxu0 0.0
  %1255 = vmatpush.msra.mxu0 0.0
  %1256 = vmatpush.msra.mxu0 0.0
  %1257 = vmatpush.msra.mxu0 0.0
  %1258 = vmatpush.msra.mxu0 0.0
  %1259 = vmatpush.msra.mxu0 0.0
  %1260 = vmatpush.msra.mxu0 0.0
  %1261 = vmatpush.msra.mxu0 0.0
  %1262 = vmatpush.msra.mxu0 0.0
  %1263 = vmatpush.msra.mxu0 0.0
  %1264 = vmatpush.msra.mxu0 0.0
  %1265 = vmatpush.msra.mxu0 %v949
  %1266 = vmatpush.msra.mxu0 %v948
  %1267 = vmatpush.msra.mxu0 %v947
  %1268 = vmatpush.msra.mxu0 %v946
  %1269 = vmatmul.f32.gmra.mxu0 %v1251
  %v1270 = vpop.f32.mrf.mxu0
  %v1271 = vadd.f32 0.0, %v1270
  %1272 = vdwg.mxu0
  %v1273 = vsel %vm954, %v879, 0
  %1275 = vmatpush.msra.mxu0 0.0
  %1276 = vmatpush.msra.mxu0 0.0
  %1277 = vmatpush.msra.mxu0 0.0
  %1278 = vmatpush.msra.mxu0 0.0
  %1279 = vmatpush.msra.mxu0 0.0
  %1280 = vmatpush.msra.mxu0 0.0
  %1281 = vmatpush.msra.mxu0 0.0
  %1282 = vmatpush.msra.mxu0 0.0
  %1283 = vmatpush.msra.mxu0 0.0
  %1284 = vmatpush.msra.mxu0 0.0
  %1285 = vmatpush.msra.mxu0 0.0
  %1286 = vmatpush.msra.mxu0 0.0
  %1287 = vmatpush.msra.mxu0 %v945
  %1288 = vmatpush.msra.mxu0 %v944
  %1289 = vmatpush.msra.mxu0 %v943
  %1290 = vmatpush.msra.mxu0 %v942
  %1291 = vmatmul.f32.gmra.mxu0 %v1273
  %v1292 = vpop.f32.mrf.mxu0
  %v1293 = vadd.f32 %v1271, %v1292
  %1294 = vdwg.mxu0
  %v1295 = vadd.f32 %v1293, %v1000
  %s1296 = scalar_lea.vmem %s7, 24
  %1297 = vst [vmem:[%s1296] sm:$0xf] %v1295
  %1298 = vrot.lane.b32.xlu0 %v486, 32
  %v1299 = vpop.permute.xlu0 %1298
  %v1300 = vsel %vm954, %v1299, 0
  %1302 = vmatpush.msra.mxu0 0.0
  %1303 = vmatpush.msra.mxu0 0.0
  %1304 = vmatpush.msra.mxu0 0.0
  %1305 = vmatpush.msra.mxu0 0.0
  %1306 = vmatpush.msra.mxu0 0.0
  %1307 = vmatpush.msra.mxu0 0.0
  %1308 = vmatpush.msra.mxu0 0.0
  %1309 = vmatpush.msra.mxu0 0.0
  %1310 = vmatpush.msra.mxu0 0.0
  %1311 = vmatpush.msra.mxu0 0.0
  %1312 = vmatpush.msra.mxu0 0.0
  %1313 = vmatpush.msra.mxu0 0.0
  %1314 = vmatpush.msra.mxu0 %v949
  %1315 = vmatpush.msra.mxu0 %v948
  %1316 = vmatpush.msra.mxu0 %v947
  %1317 = vmatpush.msra.mxu0 %v946
  %1318 = vmatmul.f32.gmra.mxu0 %v1300
  %v1319 = vpop.f32.mrf.mxu0
  %v1320 = vadd.f32 0.0, %v1319
  %1321 = vdwg.mxu0
  %1322 = vrot.lane.b32.xlu0 %v941, 64
  %v1323 = vpop.permute.xlu0 %1322
  %v1324 = vsel %vm954, %v1323, 0
  %1326 = vmatpush.msra.mxu0 0.0
  %1327 = vmatpush.msra.mxu0 0.0
  %1328 = vmatpush.msra.mxu0 0.0
  %1329 = vmatpush.msra.mxu0 0.0
  %1330 = vmatpush.msra.mxu0 0.0
  %1331 = vmatpush.msra.mxu0 0.0
  %1332 = vmatpush.msra.mxu0 0.0
  %1333 = vmatpush.msra.mxu0 0.0
  %1334 = vmatpush.msra.mxu0 0.0
  %1335 = vmatpush.msra.mxu0 0.0
  %1336 = vmatpush.msra.mxu0 0.0
  %1337 = vmatpush.msra.mxu0 0.0
  %1338 = vmatpush.msra.mxu0 %v945
  %1339 = vmatpush.msra.mxu0 %v944
  %1340 = vmatpush.msra.mxu0 %v943
  %1341 = vmatpush.msra.mxu0 %v942
  %1342 = vmatmul.f32.gmra.mxu0 %v1324
  %v1343 = vpop.f32.mrf.mxu0
  %v1344 = vadd.f32 %v1320, %v1343
  %1345 = vdwg.mxu0
  %v1346 = vadd.f32 %v1344, %v1000
  %s1347 = scalar_lea.vmem %s7, 28
  %1348 = vst [vmem:[%s1347] sm:$0xf] %v1346
  // Predicated region
  $region30: #{tagger_forward_batched.1} parent=0 // pred_check
    _
  $region31: #{tagger_forward_batched.1} parent=0 // pred_check_branch
    %1350 = sbr.rel (0) target = $region33
  $region32: #{tagger_forward_batched.1} parent=0 // pred_region
    _
  $region33: #{tagger_forward_batched.1} parent=0 // pred_fallthru
    _
  // Predicated region
  $region34: #{tagger_forward_batched.1} parent=0 // pred_check
    _
  $region35: #{tagger_forward_batched.1} parent=0 // pred_check_branch
    %1352 = sbr.rel (0) target = $region37
  $region36: #{tagger_forward_batched.1} parent=0 // pred_region
    _
  $region37: #{tagger_forward_batched.1} parent=0 // pred_fallthru
    _

</llo_original>
